<compile_context>
chip_gen: v6e
topology: v6e:2x2x1
jax: 0.10.0
libtpu: 0.0.40
codegen_flags: <defaults>
</compile_context>

<pallas_src>
import jax
import jax.numpy as jnp
from jax.experimental import pallas as pl
from jax.experimental.pallas import tpu as pltpu

EPS = 1e-5
K_IN = 28 * 28      # 784
H1 = 512
H2 = 256
N_OUT = 10
N_PAD = 128


def _bn_relu(h, gamma, beta):
    """Training-mode BatchNorm1d (batch-axis stats, biased var) folded to scale/shift, then ReLU.

    h is the f32 matmul accumulator; the Linear bias is omitted upstream because it is exactly
    cancelled by the mean subtraction here.
    """
    mu = jnp.mean(h, axis=0, keepdims=True)
    var = jnp.mean((h - mu) * (h - mu), axis=0, keepdims=True)
    scale = gamma * jax.lax.rsqrt(var + EPS)          # (1, F)
    shift = beta - mu * scale                         # (1, F)
    return jnp.maximum(h * scale + shift, 0.0)


def mlp_kernel(x_ref,
               w1_ref, g1_ref, be1_ref,
               w2_ref, g2_ref, be2_ref,
               w3_ref, b3_ref,
               o_ref):
    x = x_ref[...]                                                          # (B, 784) bf16

    # fc1 (bias absorbed by BN) -> bn1 -> relu   (dropout1 = identity, see TODO)
    h1 = jnp.dot(x, w1_ref[...], preferred_element_type=jnp.float32)        # (B, 512) f32
    h1 = _bn_relu(h1, g1_ref[...], be1_ref[...])

    # fc2 (bias absorbed by BN) -> bn2 -> relu   (dropout2 = identity)
    h2 = jnp.dot(h1.astype(jnp.bfloat16), w2_ref[...],
                 preferred_element_type=jnp.float32)                        # (B, 256) f32
    h2 = _bn_relu(h2, g2_ref[...], be2_ref[...])

    # fc3 -> padded, lane-dense (B, 128) output
    o_ref[...] = jnp.dot(h2.astype(jnp.bfloat16), w3_ref[...],
                         preferred_element_type=jnp.float32) + b3_ref[...]


def prepare_params(params):
    """One-time parameter preparation (hoisted out of the per-call forward path).

    Casts matmul weights to bf16 and zero-pads the fc3 output features 10 -> 128 so the
    kernel's final store is lane-dense. fc1/fc2 biases are dropped (absorbed by train-mode BN).
    """
    (w1, b1, g1, be1, w2, b2, g2, be2, w3, b3) = params
    del b1, b2  # mathematically redundant: Linear bias directly before train-mode BN cancels out
    w1_b = w1.astype(jnp.bfloat16)                                          # (784, 512)
    w2_b = w2.astype(jnp.bfloat16)                                          # (512, 256)
    w3_p = jnp.pad(w3, ((0, 0), (0, N_PAD - N_OUT))).astype(jnp.bfloat16)   # (256, 128)
    b3_p = jnp.pad(b3, ((0, 0), (0, N_PAD - N_OUT)))                        # (1, 128) f32
    return (w1_b, g1, be1, w2_b, g2, be2, w3_p, b3_p)


@jax.jit
def mlp_forward(x_nchw, prepped_params):
    """Forward pass. `prepped_params` must come from prepare_params() (called once)."""
    B = x_nchw.shape[0]
    # Only per-call host-side work: flatten + bf16 cast of the activations (no pad/copy).
    x = x_nchw.reshape(B, K_IN).astype(jnp.bfloat16)                        # (B, 784)
    inputs = (x,) + tuple(prepped_params)

    def full_spec(a):
        # whole array resident in VMEM; single grid point (appropriate for small B, see TODO)
        return pl.BlockSpec(a.shape, lambda i, _nd=a.ndim: (0,) * _nd)

    out_padded = pl.pallas_call(
        mlp_kernel,
        out_shape=jax.ShapeDtypeStruct((B, N_PAD), jnp.float32),
        grid=(1,),
        in_specs=[full_spec(a) for a in inputs],
        out_specs=pl.BlockSpec((B, N_PAD), lambda i: (0, 0)),
        compiler_params=pltpu.CompilerParams(
            dimension_semantics=("arbitrary",),
            vmem_limit_bytes=16 << 20,
        ),
    )(*inputs)

    return out_padded[:, :N_OUT]


def init_params(key):
    ks = jax.random.split(key, 6)

    def linear(kw, kb, fan_in, fan_out):
        bound = 1.0 / jnp.sqrt(fan_in)
        w = jax.random.uniform(kw, (fan_in, fan_out), jnp.float32, -bound, bound)
        b = jax.random.uniform(kb, (1, fan_out), jnp.float32, -bound, bound)
        return w, b

    w1, b1 = linear(ks[0], ks[1], K_IN, H1)
    w2, b2 = linear(ks[2], ks[3], H1, H2)
    w3, b3 = linear(ks[4], ks[5], H2, N_OUT)
    # BatchNorm1d affine params: gamma=1, beta=0 (PyTorch defaults)
    g1, be1 = jnp.ones((1, H1), jnp.float32), jnp.zeros((1, H1), jnp.float32)
    g2, be2 = jnp.ones((1, H2), jnp.float32), jnp.zeros((1, H2), jnp.float32)
    return (w1, b1, g1, be1, w2, b2, g2, be2, w3, b3)


def mlp_reference(x_nchw, params, matmul_dtype=jnp.bfloat16):
    """Pure-JAX reference: full PyTorch-style forward *including* the fc1/fc2 biases
    (which the kernel omits as mathematically redundant before training-mode BN).
    matmul_dtype=bfloat16 matches the kernel's mixed precision; float32 gives a
    full-precision accuracy check."""
    (w1, b1, g1, be1, w2, b2, g2, be2, w3, b3) = params
    x = x_nchw.reshape(x_nchw.shape[0], -1).astype(jnp.float32)

    def bn(h, g, b):
        mu = jnp.mean(h, axis=0, keepdims=True)
        var = jnp.mean((h - mu) ** 2, axis=0, keepdims=True)
        return (h - mu) * jax.lax.rsqrt(var + EPS) * g + b

    def dot_md(a, w):
        return jnp.dot(a.astype(matmul_dtype), w.astype(matmul_dtype),
                       preferred_element_type=jnp.float32)

    h = jnp.maximum(bn(dot_md(x, w1) + b1, g1, be1), 0.0)
    h = jnp.maximum(bn(dot_md(h, w2) + b2, g2, be2), 0.0)
    return dot_md(h, w3) + b3


if __name__ == "__main__":
    key = jax.random.PRNGKey(0)
    k_x, k_p = jax.random.split(key)

    # Small MNIST-like batch: NCHW (B=16, C=1, H=28, W=28). B multiple of 16 for bf16 packing.
    x = jax.random.normal(k_x, (16, 1, 28, 28), dtype=jnp.float32)
    params = init_params(k_p)

    # One-time weight preparation (hoisted out of the forward path).
    prepped = prepare_params(params)

    out = jax.block_until_ready(mlp_forward(x, prepped))
    assert out.shape == (16, N_OUT)

    # Self-consistency vs. a bf16-matmul reference (tight tolerance) ...
    ref_bf16 = mlp_reference(x, params, matmul_dtype=jnp.bfloat16)
    assert jnp.allclose(out, ref_bf16, atol=2e-3, rtol=2e-3), "mismatch vs. bf16 reference"
    # ... and accuracy vs. a full-f32 reference (loose tolerance for bf16 matmul rounding).
    ref_f32 = mlp_reference(x, params, matmul_dtype=jnp.float32)
    assert jnp.allclose(out, ref_f32, atol=5e-2, rtol=5e-2), "mismatch vs. f32 reference"

    print("KERNEL_OK")
</pallas_src>

<mosaic_0001>
module attributes {stable_mosaic.version = 11 : i64} {
  func.func @mlp_kernel(%arg0: i32, %arg1: memref<16x784xbf16, #tpu.memory_space<vmem>>, %arg2: memref<784x512xbf16, #tpu.memory_space<vmem>>, %arg3: memref<1x512xf32, #tpu.memory_space<vmem>>, %arg4: memref<1x512xf32, #tpu.memory_space<vmem>>, %arg5: memref<512x256xbf16, #tpu.memory_space<vmem>>, %arg6: memref<1x256xf32, #tpu.memory_space<vmem>>, %arg7: memref<1x256xf32, #tpu.memory_space<vmem>>, %arg8: memref<256x128xbf16, #tpu.memory_space<vmem>>, %arg9: memref<1x128xf32, #tpu.memory_space<vmem>>, %arg10: memref<16x128xf32, #tpu.memory_space<vmem>>) attributes {dimension_semantics = [#tpu.dimension_semantics<arbitrary>], iteration_bounds = array<i64: 1>, scalar_prefetch = 0 : i64, scratch_operands = 0 : i64, tpu.core_type = #tpu.core_type<tc>, window_params = [{pipeline_mode = #tpu.pipeline_mode<synchronous>, transform_indices = @transform_0, window_bounds = array<i64: 16, 784>}, {pipeline_mode = #tpu.pipeline_mode<synchronous>, transform_indices = @transform_1, window_bounds = array<i64: 784, 512>}, {pipeline_mode = #tpu.pipeline_mode<synchronous>, transform_indices = @transform_2, window_bounds = array<i64: 1, 512>}, {pipeline_mode = #tpu.pipeline_mode<synchronous>, transform_indices = @transform_3, window_bounds = array<i64: 1, 512>}, {pipeline_mode = #tpu.pipeline_mode<synchronous>, transform_indices = @transform_4, window_bounds = array<i64: 512, 256>}, {pipeline_mode = #tpu.pipeline_mode<synchronous>, transform_indices = @transform_5, window_bounds = array<i64: 1, 256>}, {pipeline_mode = #tpu.pipeline_mode<synchronous>, transform_indices = @transform_6, window_bounds = array<i64: 1, 256>}, {pipeline_mode = #tpu.pipeline_mode<synchronous>, transform_indices = @transform_7, window_bounds = array<i64: 256, 128>}, {pipeline_mode = #tpu.pipeline_mode<synchronous>, transform_indices = @transform_8, window_bounds = array<i64: 1, 128>}, {pipeline_mode = #tpu.pipeline_mode<synchronous>, transform_indices = @transform_9, window_bounds = array<i64: 16, 128>}]} {
    %c0 = arith.constant 0 : index
    %c0_0 = arith.constant 0 : index
    %0 = vector.load %arg1[%c0, %c0_0] : memref<16x784xbf16, #tpu.memory_space<vmem>>, vector<16x784xbf16>
    %c0_1 = arith.constant 0 : index
    %c0_2 = arith.constant 0 : index
    %1 = vector.load %arg2[%c0_1, %c0_2] : memref<784x512xbf16, #tpu.memory_space<vmem>>, vector<784x512xbf16>
    %cst = arith.constant dense<0.000000e+00> : vector<16x512xf32>
    %2 = tpu.matmul %0, %1, %cst {dimension_numbers = #tpu.dot_dimension_numbers<[1], [0], [0], [1], [0, 0, 1, 1], [], []>} : vector<16x784xbf16>, vector<784x512xbf16>, vector<16x512xf32> -> vector<16x512xf32>
    %c0_3 = arith.constant 0 : index
    %c0_4 = arith.constant 0 : index
    %3 = vector.load %arg3[%c0_3, %c0_4] : memref<1x512xf32, #tpu.memory_space<vmem>>, vector<1x512xf32>
    %c0_5 = arith.constant 0 : index
    %c0_6 = arith.constant 0 : index
    %4 = vector.load %arg4[%c0_5, %c0_6] : memref<1x512xf32, #tpu.memory_space<vmem>>, vector<1x512xf32>
    %cst_7 = arith.constant dense<0.000000e+00> : vector<512xf32>
    %5 = vector.multi_reduction <add>, %2, %cst_7 [0] : vector<16x512xf32> to vector<512xf32>
    %6 = vector.shape_cast %5 : vector<512xf32> to vector<1x512xf32>
    %cst_8 = arith.constant 1.600000e+01 : f32
    %7 = vector.broadcast %cst_8 : f32 to vector<1x512xf32>
    %8 = arith.divf %6, %7 : vector<1x512xf32>
    %9 = vector.broadcast %8 : vector<1x512xf32> to vector<16x512xf32>
    %10 = arith.subf %2, %9 : vector<16x512xf32>
    %11 = vector.broadcast %8 : vector<1x512xf32> to vector<16x512xf32>
    %12 = arith.subf %2, %11 : vector<16x512xf32>
    %13 = arith.mulf %10, %12 : vector<16x512xf32>
    %cst_9 = arith.constant dense<0.000000e+00> : vector<512xf32>
    %14 = vector.multi_reduction <add>, %13, %cst_9 [0] : vector<16x512xf32> to vector<512xf32>
    %15 = vector.shape_cast %14 : vector<512xf32> to vector<1x512xf32>
    %cst_10 = arith.constant 1.600000e+01 : f32
    %16 = vector.broadcast %cst_10 : f32 to vector<1x512xf32>
    %17 = arith.divf %15, %16 : vector<1x512xf32>
    %cst_11 = arith.constant 9.99999974E-6 : f32
    %18 = vector.broadcast %cst_11 : f32 to vector<1x512xf32>
    %19 = arith.addf %17, %18 : vector<1x512xf32>
    %20 = math.rsqrt %19 : vector<1x512xf32>
    %21 = arith.mulf %3, %20 : vector<1x512xf32>
    %22 = arith.mulf %8, %21 : vector<1x512xf32>
    %23 = arith.subf %4, %22 : vector<1x512xf32>
    %24 = vector.broadcast %21 : vector<1x512xf32> to vector<16x512xf32>
    %25 = arith.mulf %2, %24 : vector<16x512xf32>
    %26 = vector.broadcast %23 : vector<1x512xf32> to vector<16x512xf32>
    %27 = arith.addf %25, %26 : vector<16x512xf32>
    %cst_12 = arith.constant 0.000000e+00 : f32
    %28 = vector.broadcast %cst_12 : f32 to vector<16x512xf32>
    %29 = arith.maximumf %27, %28 : vector<16x512xf32>
    %30 = arith.truncf %29 : vector<16x512xf32> to vector<16x512xbf16>
    %c0_13 = arith.constant 0 : index
    %c0_14 = arith.constant 0 : index
    %31 = vector.load %arg5[%c0_13, %c0_14] : memref<512x256xbf16, #tpu.memory_space<vmem>>, vector<512x256xbf16>
    %cst_15 = arith.constant dense<0.000000e+00> : vector<16x256xf32>
    %32 = tpu.matmul %30, %31, %cst_15 {dimension_numbers = #tpu.dot_dimension_numbers<[1], [0], [0], [1], [0, 0, 1, 1], [], []>} : vector<16x512xbf16>, vector<512x256xbf16>, vector<16x256xf32> -> vector<16x256xf32>
    %c0_16 = arith.constant 0 : index
    %c0_17 = arith.constant 0 : index
    %33 = vector.load %arg6[%c0_16, %c0_17] : memref<1x256xf32, #tpu.memory_space<vmem>>, vector<1x256xf32>
    %c0_18 = arith.constant 0 : index
    %c0_19 = arith.constant 0 : index
    %34 = vector.load %arg7[%c0_18, %c0_19] : memref<1x256xf32, #tpu.memory_space<vmem>>, vector<1x256xf32>
    %cst_20 = arith.constant dense<0.000000e+00> : vector<256xf32>
    %35 = vector.multi_reduction <add>, %32, %cst_20 [0] : vector<16x256xf32> to vector<256xf32>
    %36 = vector.shape_cast %35 : vector<256xf32> to vector<1x256xf32>
    %cst_21 = arith.constant 1.600000e+01 : f32
    %37 = vector.broadcast %cst_21 : f32 to vector<1x256xf32>
    %38 = arith.divf %36, %37 : vector<1x256xf32>
    %39 = vector.broadcast %38 : vector<1x256xf32> to vector<16x256xf32>
    %40 = arith.subf %32, %39 : vector<16x256xf32>
    %41 = vector.broadcast %38 : vector<1x256xf32> to vector<16x256xf32>
    %42 = arith.subf %32, %41 : vector<16x256xf32>
    %43 = arith.mulf %40, %42 : vector<16x256xf32>
    %cst_22 = arith.constant dense<0.000000e+00> : vector<256xf32>
    %44 = vector.multi_reduction <add>, %43, %cst_22 [0] : vector<16x256xf32> to vector<256xf32>
    %45 = vector.shape_cast %44 : vector<256xf32> to vector<1x256xf32>
    %cst_23 = arith.constant 1.600000e+01 : f32
    %46 = vector.broadcast %cst_23 : f32 to vector<1x256xf32>
    %47 = arith.divf %45, %46 : vector<1x256xf32>
    %cst_24 = arith.constant 9.99999974E-6 : f32
    %48 = vector.broadcast %cst_24 : f32 to vector<1x256xf32>
    %49 = arith.addf %47, %48 : vector<1x256xf32>
    %50 = math.rsqrt %49 : vector<1x256xf32>
    %51 = arith.mulf %33, %50 : vector<1x256xf32>
    %52 = arith.mulf %38, %51 : vector<1x256xf32>
    %53 = arith.subf %34, %52 : vector<1x256xf32>
    %54 = vector.broadcast %51 : vector<1x256xf32> to vector<16x256xf32>
    %55 = arith.mulf %32, %54 : vector<16x256xf32>
    %56 = vector.broadcast %53 : vector<1x256xf32> to vector<16x256xf32>
    %57 = arith.addf %55, %56 : vector<16x256xf32>
    %cst_25 = arith.constant 0.000000e+00 : f32
    %58 = vector.broadcast %cst_25 : f32 to vector<16x256xf32>
    %59 = arith.maximumf %57, %58 : vector<16x256xf32>
    %60 = arith.truncf %59 : vector<16x256xf32> to vector<16x256xbf16>
    %c0_26 = arith.constant 0 : index
    %c0_27 = arith.constant 0 : index
    %61 = vector.load %arg8[%c0_26, %c0_27] : memref<256x128xbf16, #tpu.memory_space<vmem>>, vector<256x128xbf16>
    %cst_28 = arith.constant dense<0.000000e+00> : vector<16x128xf32>
    %62 = tpu.matmul %60, %61, %cst_28 {dimension_numbers = #tpu.dot_dimension_numbers<[1], [0], [0], [1], [0, 0, 1, 1], [], []>} : vector<16x256xbf16>, vector<256x128xbf16>, vector<16x128xf32> -> vector<16x128xf32>
    %c0_29 = arith.constant 0 : index
    %c0_30 = arith.constant 0 : index
    %63 = vector.load %arg9[%c0_29, %c0_30] : memref<1x128xf32, #tpu.memory_space<vmem>>, vector<1x128xf32>
    %64 = vector.broadcast %63 : vector<1x128xf32> to vector<16x128xf32>
    %65 = arith.addf %62, %64 : vector<16x128xf32>
    %c0_31 = arith.constant 0 : index
    %c0_32 = arith.constant 0 : index
    %66 = vector.load %arg10[%c0_31, %c0_32] : memref<16x128xf32, #tpu.memory_space<vmem>>, vector<16x128xf32>
    tpu.vector_store %arg10[%c0_31, %c0_32], %65 {strides = array<i32>} : memref<16x128xf32, #tpu.memory_space<vmem>>, vector<16x128xf32>,
    return
  }
  func.func @transform_0(%arg0: i32) -> (i32, i32) {
    %c0_i32 = arith.constant 0 : i32
    %c0_i32_0 = arith.constant 0 : i32
    %c0_i32_1 = arith.constant 0 : i32
    return %c0_i32, %c0_i32_0 : i32, i32
  }
  func.func @transform_1(%arg0: i32) -> (i32, i32) {
    %c0_i32 = arith.constant 0 : i32
    %c0_i32_0 = arith.constant 0 : i32
    %c0_i32_1 = arith.constant 0 : i32
    return %c0_i32, %c0_i32_0 : i32, i32
  }
  func.func @transform_2(%arg0: i32) -> (i32, i32) {
    %c0_i32 = arith.constant 0 : i32
    %c0_i32_0 = arith.constant 0 : i32
    %c0_i32_1 = arith.constant 0 : i32
    return %c0_i32, %c0_i32_0 : i32, i32
  }
  func.func @transform_3(%arg0: i32) -> (i32, i32) {
    %c0_i32 = arith.constant 0 : i32
    %c0_i32_0 = arith.constant 0 : i32
    %c0_i32_1 = arith.constant 0 : i32
    return %c0_i32, %c0_i32_0 : i32, i32
  }
  func.func @transform_4(%arg0: i32) -> (i32, i32) {
    %c0_i32 = arith.constant 0 : i32
    %c0_i32_0 = arith.constant 0 : i32
    %c0_i32_1 = arith.constant 0 : i32
    return %c0_i32, %c0_i32_0 : i32, i32
  }
  func.func @transform_5(%arg0: i32) -> (i32, i32) {
    %c0_i32 = arith.constant 0 : i32
    %c0_i32_0 = arith.constant 0 : i32
    %c0_i32_1 = arith.constant 0 : i32
    return %c0_i32, %c0_i32_0 : i32, i32
  }
  func.func @transform_6(%arg0: i32) -> (i32, i32) {
    %c0_i32 = arith.constant 0 : i32
    %c0_i32_0 = arith.constant 0 : i32
    %c0_i32_1 = arith.constant 0 : i32
    return %c0_i32, %c0_i32_0 : i32, i32
  }
  func.func @transform_7(%arg0: i32) -> (i32, i32) {
    %c0_i32 = arith.constant 0 : i32
    %c0_i32_0 = arith.constant 0 : i32
    %c0_i32_1 = arith.constant 0 : i32
    return %c0_i32, %c0_i32_0 : i32, i32
  }
  func.func @transform_8(%arg0: i32) -> (i32, i32) {
    %c0_i32 = arith.constant 0 : i32
    %c0_i32_0 = arith.constant 0 : i32
    %c0_i32_1 = arith.constant 0 : i32
    return %c0_i32, %c0_i32_0 : i32, i32
  }
  func.func @transform_9(%arg0: i32) -> (i32, i32) {
    %c0_i32 = arith.constant 0 : i32
    %c0_i32_0 = arith.constant 0 : i32
    %c0_i32_1 = arith.constant 0 : i32
    return %c0_i32, %c0_i32_0 : i32, i32
  }
}

</mosaic_0001>

<llo_original>
// kernel: mlp_forward.1
$region0: #{mlp_forward.1}
  #allocation0 [shape = 'u32[]', space=smem, size = 0x4, offset = 0x4, fixed_abs, tag = 'smem constant byte address 0x4 - core index']
  #allocation1 [shape = 'u32[144,128]{1,0:T(1,128)}', space=vmem, size = 0x12000, scoped, tag = 'internal scratch']
  %s0 = inlined_call_operand.vmem [shape: bf16[16,784], index: 0, kind: input, shape index: {}]
  %s1 = inlined_call_operand.hbm [shape: bf16[784,512], index: 1, kind: input, shape index: {}]
  %s2 = inlined_call_operand.vmem [shape: f32[1,512], index: 2, kind: input, shape index: {}]
  %s3 = inlined_call_operand.vmem [shape: f32[1,512], index: 3, kind: input, shape index: {}]
  %s4 = inlined_call_operand.vmem [shape: bf16[512,256], index: 4, kind: input, shape index: {}]
  %s5 = inlined_call_operand.vmem [shape: f32[1,256], index: 5, kind: input, shape index: {}]
  %s6 = inlined_call_operand.vmem [shape: f32[1,256], index: 6, kind: input, shape index: {}]
  %s7 = inlined_call_operand.vmem [shape: bf16[256,128], index: 7, kind: input, shape index: {}]
  %s8 = inlined_call_operand.vmem [shape: f32[1,128], index: 8, kind: input, shape index: {}]
  %s9 = inlined_call_operand.hbm [shape: f32[16,128], index: 9, kind: output, shape index: {}]
  %s10 = sld [smem:[#allocation0]]
  $region50: #{mlp_forward.1} parent=0
    _
  %s12 = ssub.s32 1, %s10
  %s13 = scalar_select 0, %s12, %s10
  $region1: #{mlp_forward.1} parent=0
    #allocation2 [shape = 'u8[802816]{0}', space=vmem, size = 0xc4000, scoped, tag = 'input window, operand 1, single buffered']
    #allocation3 [shape = 's32[1]{0}', space=sflag, size = 0x4, scoped, tag = 'scoped memory for mlp_forward.1']
    #allocation4 [shape = 's32[1]{0}', space=sflag, size = 0x4, scoped, tag = 'scoped memory for mlp_forward.1']
    #allocation5 [shape = 'u8[8192]{0}', space=vmem, size = 0x2000, scoped, tag = 'output window, operand 0, single buffered']
    %14 = vsyncpa [#allocation3], 0
    %15 = vsyncpa [#allocation4], 0
    // Predicated region
    $region2: #{mlp_forward.1} parent=1 // pred_check
      _
    $region3: #{mlp_forward.1} parent=1 // pred_check_branch
      %17 = sbr.rel (0) target = $region5
    $region4: #{mlp_forward.1} parent=1 // pred_region
      _
    $region5: #{mlp_forward.1} parent=1 // pred_fallthru
      _
    // Predicated region
    $region6: #{mlp_forward.1} parent=1 // pred_check
      _
    $region7: #{mlp_forward.1} parent=1 // pred_check_branch
      %19 = sbr.rel (0) target = $region9
    $region8: #{mlp_forward.1} parent=1 // pred_region
      %s21 = ssub.s32 25088, 25088
      %22 = vsyncadd [#allocation3], %s21
      %s23 = sshll.u32 [#allocation2], 4
      %s24 = int_to_ptr.vmem [resolvable:$true] %s23
      %29 = dma.hbm_to_vmem [thread:$0]  %s1, 25088, %s24, [#allocation3], 256, 256, 16
    $region9: #{mlp_forward.1} parent=1 // pred_fallthru
      _
    // Predicated region
    $region10: #{mlp_forward.1} parent=1 // pred_check
      _
    $region11: #{mlp_forward.1} parent=1 // pred_check_branch
      %31 = sbr.rel (0) target = $region13
    $region12: #{mlp_forward.1} parent=1 // pred_region
      _
    $region13: #{mlp_forward.1} parent=1 // pred_fallthru
      _
    // Predicated region
    $region14: #{mlp_forward.1} parent=1 // pred_check
      _
    $region15: #{mlp_forward.1} parent=1 // pred_check_branch
      %33 = sbr.rel (0) target = $region17
    $region16: #{mlp_forward.1} parent=1 // pred_region
      _
    $region17: #{mlp_forward.1} parent=1 // pred_fallthru
      _
    // Predicated region
    $region18: #{mlp_forward.1} parent=1 // pred_check
      _
    $region19: #{mlp_forward.1} parent=1 // pred_check_branch
      %35 = sbr.rel (0) target = $region21
    $region20: #{mlp_forward.1} parent=1 // pred_region
      _
    $region21: #{mlp_forward.1} parent=1 // pred_fallthru
      _
    // Predicated region
    $region22: #{mlp_forward.1} parent=1 // pred_check
      _
    $region23: #{mlp_forward.1} parent=1 // pred_check_branch
      %37 = sbr.rel (0) target = $region25
    $region24: #{mlp_forward.1} parent=1 // pred_region
      _
    $region25: #{mlp_forward.1} parent=1 // pred_fallthru
      _
    // Predicated region
    $region26: #{mlp_forward.1} parent=1 // pred_check
      _
    $region27: #{mlp_forward.1} parent=1 // pred_check_branch
      %39 = sbr.rel (0) target = $region29
    $region28: #{mlp_forward.1} parent=1 // pred_region
      _
    $region29: #{mlp_forward.1} parent=1 // pred_fallthru
      _
    // Predicated region
    $region30: #{mlp_forward.1} parent=1 // pred_check
      _
    $region31: #{mlp_forward.1} parent=1 // pred_check_branch
      %41 = sbr.rel (0) target = $region33
    $region32: #{mlp_forward.1} parent=1 // pred_region
      _
    $region33: #{mlp_forward.1} parent=1 // pred_fallthru
      _
    // Predicated region
    $region34: #{mlp_forward.1} parent=1 // pred_check
      _
    $region35: #{mlp_forward.1} parent=1 // pred_check_branch
      %43 = sbr.rel (0) target = $region37
    $region36: #{mlp_forward.1} parent=1 // pred_region
      _
    $region37: #{mlp_forward.1} parent=1 // pred_fallthru
      _
    // Predicated region
    $region38: #{mlp_forward.1} parent=1 // pred_check
      _
    $region39: #{mlp_forward.1} parent=1 // pred_check_branch
      %45 = sbr.rel (0) target = $region41
    $region40: #{mlp_forward.1} parent=1 // pred_region
      %46 = dma.done [#allocation3], 25088
    $region41: #{mlp_forward.1} parent=1 // pred_fallthru
      _
    %v48 = vld [vmem:[%s0] sm:$0xff]
    %v49 = vld [vmem:[%s0 + $0x8] sm:$0xff]
    %v50 = vld [vmem:[%s0 + $0x10] sm:$0xff]
    %v51 = vld [vmem:[%s0 + $0x18] sm:$0xf]
    %v52 = vld [vmem:[%s0 + $0x1c] sm:$0xff]
    %v53 = vld [vmem:[%s0 + $0x24] sm:$0xff]
    %v54 = vld [vmem:[%s0 + $0x2c] sm:$0xff]
    %v55 = vld [vmem:[%s0 + $0x34] sm:$0xf]
    %v56 = vld [vmem:[#allocation2] sm:$0xff]
    %v57 = vld [vmem:[#allocation2 + $0x8] sm:$0xff]
    %v58 = vld [vmem:[#allocation2 + $0x10] sm:$0xff]
    %v59 = vld [vmem:[#allocation2 + $0x18] sm:$0xff]
    %v60 = vld [vmem:[#allocation2 + $0x20] sm:$0xff]
    %v61 = vld [vmem:[#allocation2 + $0x28] sm:$0xff]
    %v62 = vld [vmem:[#allocation2 + $0x30] sm:$0xff]
    %v63 = vld [vmem:[#allocation2 + $0x38] sm:$0xff]
    %v64 = vld [vmem:[#allocation2 + $0x40] sm:$0xff]
    %v65 = vld [vmem:[#allocation2 + $0x48] sm:$0xff]
    %v66 = vld [vmem:[#allocation2 + $0x50] sm:$0xff]
    %v67 = vld [vmem:[#allocation2 + $0x58] sm:$0xff]
    %v68 = vld [vmem:[#allocation2 + $0x60] sm:$0xff]
    %v69 = vld [vmem:[#allocation2 + $0x68] sm:$0xff]
    %v70 = vld [vmem:[#allocation2 + $0x70] sm:$0xff]
    %v71 = vld [vmem:[#allocation2 + $0x78] sm:$0xff]
    %v72 = vld [vmem:[#allocation2 + $0x80] sm:$0xff]
    %v73 = vld [vmem:[#allocation2 + $0x88] sm:$0xff]
    %v74 = vld [vmem:[#allocation2 + $0x90] sm:$0xff]
    %v75 = vld [vmem:[#allocation2 + $0x98] sm:$0xff]
    %v76 = vld [vmem:[#allocation2 + $0xa0] sm:$0xff]
    %v77 = vld [vmem:[#allocation2 + $0xa8] sm:$0xff]
    %v78 = vld [vmem:[#allocation2 + $0xb0] sm:$0xff]
    %v79 = vld [vmem:[#allocation2 + $0xb8] sm:$0xff]
    %v80 = vld [vmem:[#allocation2 + $0xc0] sm:$0xff]
    %v81 = vld [vmem:[#allocation2 + $0xc8] sm:$0xff]
    %v82 = vld [vmem:[#allocation2 + $0xd0] sm:$0xff]
    %v83 = vld [vmem:[#allocation2 + $0xd8] sm:$0xff]
    %v84 = vld [vmem:[#allocation2 + $0xe0] sm:$0xff]
    %v85 = vld [vmem:[#allocation2 + $0xe8] sm:$0xff]
    %v86 = vld [vmem:[#allocation2 + $0xf0] sm:$0xff]
    %v87 = vld [vmem:[#allocation2 + $0xf8] sm:$0xff]
    %v88 = vld [vmem:[#allocation2 + $0x100] sm:$0xff]
    %v89 = vld [vmem:[#allocation2 + $0x108] sm:$0xff]
    %v90 = vld [vmem:[#allocation2 + $0x110] sm:$0xff]
    %v91 = vld [vmem:[#allocation2 + $0x118] sm:$0xff]
    %v92 = vld [vmem:[#allocation2 + $0x120] sm:$0xff]
    %v93 = vld [vmem:[#allocation2 + $0x128] sm:$0xff]
    %v94 = vld [vmem:[#allocation2 + $0x130] sm:$0xff]
    %v95 = vld [vmem:[#allocation2 + $0x138] sm:$0xff]
    %v96 = vld [vmem:[#allocation2 + $0x140] sm:$0xff]
    %v97 = vld [vmem:[#allocation2 + $0x148] sm:$0xff]
    %v98 = vld [vmem:[#allocation2 + $0x150] sm:$0xff]
    %v99 = vld [vmem:[#allocation2 + $0x158] sm:$0xff]
    %v100 = vld [vmem:[#allocation2 + $0x160] sm:$0xff]
    %v101 = vld [vmem:[#allocation2 + $0x168] sm:$0xff]
    %v102 = vld [vmem:[#allocation2 + $0x170] sm:$0xff]
    %v103 = vld [vmem:[#allocation2 + $0x178] sm:$0xff]
    %v104 = vld [vmem:[#allocation2 + $0x180] sm:$0xff]
    %v105 = vld [vmem:[#allocation2 + $0x188] sm:$0xff]
    %v106 = vld [vmem:[#allocation2 + $0x190] sm:$0xff]
    %v107 = vld [vmem:[#allocation2 + $0x198] sm:$0xff]
    %v108 = vld [vmem:[#allocation2 + $0x1a0] sm:$0xff]
    %v109 = vld [vmem:[#allocation2 + $0x1a8] sm:$0xff]
    %v110 = vld [vmem:[#allocation2 + $0x1b0] sm:$0xff]
    %v111 = vld [vmem:[#allocation2 + $0x1b8] sm:$0xff]
    %v112 = vld [vmem:[#allocation2 + $0x1c0] sm:$0xff]
    %v113 = vld [vmem:[#allocation2 + $0x1c8] sm:$0xff]
    %v114 = vld [vmem:[#allocation2 + $0x1d0] sm:$0xff]
    %v115 = vld [vmem:[#allocation2 + $0x1d8] sm:$0xff]
    %v116 = vld [vmem:[#allocation2 + $0x1e0] sm:$0xff]
    %v117 = vld [vmem:[#allocation2 + $0x1e8] sm:$0xff]
    %v118 = vld [vmem:[#allocation2 + $0x1f0] sm:$0xff]
    %v119 = vld [vmem:[#allocation2 + $0x1f8] sm:$0xff]
    %v120 = vld [vmem:[#allocation2 + $0x200] sm:$0xff]
    %v121 = vld [vmem:[#allocation2 + $0x208] sm:$0xff]
    %v122 = vld [vmem:[#allocation2 + $0x210] sm:$0xff]
    %v123 = vld [vmem:[#allocation2 + $0x218] sm:$0xff]
    %v124 = vld [vmem:[#allocation2 + $0x220] sm:$0xff]
    %v125 = vld [vmem:[#allocation2 + $0x228] sm:$0xff]
    %v126 = vld [vmem:[#allocation2 + $0x230] sm:$0xff]
    %v127 = vld [vmem:[#allocation2 + $0x238] sm:$0xff]
    %v128 = vld [vmem:[#allocation2 + $0x240] sm:$0xff]
    %v129 = vld [vmem:[#allocation2 + $0x248] sm:$0xff]
    %v130 = vld [vmem:[#allocation2 + $0x250] sm:$0xff]
    %v131 = vld [vmem:[#allocation2 + $0x258] sm:$0xff]
    %v132 = vld [vmem:[#allocation2 + $0x260] sm:$0xff]
    %v133 = vld [vmem:[#allocation2 + $0x268] sm:$0xff]
    %v134 = vld [vmem:[#allocation2 + $0x270] sm:$0xff]
    %v135 = vld [vmem:[#allocation2 + $0x278] sm:$0xff]
    %v136 = vld [vmem:[#allocation2 + $0x280] sm:$0xff]
    %v137 = vld [vmem:[#allocation2 + $0x288] sm:$0xff]
    %v138 = vld [vmem:[#allocation2 + $0x290] sm:$0xff]
    %v139 = vld [vmem:[#allocation2 + $0x298] sm:$0xff]
    %v140 = vld [vmem:[#allocation2 + $0x2a0] sm:$0xff]
    %v141 = vld [vmem:[#allocation2 + $0x2a8] sm:$0xff]
    %v142 = vld [vmem:[#allocation2 + $0x2b0] sm:$0xff]
    %v143 = vld [vmem:[#allocation2 + $0x2b8] sm:$0xff]
    %v144 = vld [vmem:[#allocation2 + $0x2c0] sm:$0xff]
    %v145 = vld [vmem:[#allocation2 + $0x2c8] sm:$0xff]
    %v146 = vld [vmem:[#allocation2 + $0x2d0] sm:$0xff]
    %v147 = vld [vmem:[#allocation2 + $0x2d8] sm:$0xff]
    %v148 = vld [vmem:[#allocation2 + $0x2e0] sm:$0xff]
    %v149 = vld [vmem:[#allocation2 + $0x2e8] sm:$0xff]
    %v150 = vld [vmem:[#allocation2 + $0x2f0] sm:$0xff]
    %v151 = vld [vmem:[#allocation2 + $0x2f8] sm:$0xff]
    %v152 = vld [vmem:[#allocation2 + $0x300] sm:$0xff]
    %v153 = vld [vmem:[#allocation2 + $0x308] sm:$0xff]
    %v154 = vld [vmem:[#allocation2 + $0x310] sm:$0xff]
    %v155 = vld [vmem:[#allocation2 + $0x318] sm:$0xff]
    %v156 = vld [vmem:[#allocation2 + $0x320] sm:$0xff]
    %v157 = vld [vmem:[#allocation2 + $0x328] sm:$0xff]
    %v158 = vld [vmem:[#allocation2 + $0x330] sm:$0xff]
    %v159 = vld [vmem:[#allocation2 + $0x338] sm:$0xff]
    %v160 = vld [vmem:[#allocation2 + $0x340] sm:$0xff]
    %v161 = vld [vmem:[#allocation2 + $0x348] sm:$0xff]
    %v162 = vld [vmem:[#allocation2 + $0x350] sm:$0xff]
    %v163 = vld [vmem:[#allocation2 + $0x358] sm:$0xff]
    %v164 = vld [vmem:[#allocation2 + $0x360] sm:$0xff]
    %v165 = vld [vmem:[#allocation2 + $0x368] sm:$0xff]
    %v166 = vld [vmem:[#allocation2 + $0x370] sm:$0xff]
    %v167 = vld [vmem:[#allocation2 + $0x378] sm:$0xff]
    %v168 = vld [vmem:[#allocation2 + $0x380] sm:$0xff]
    %v169 = vld [vmem:[#allocation2 + $0x388] sm:$0xff]
    %v170 = vld [vmem:[#allocation2 + $0x390] sm:$0xff]
    %v171 = vld [vmem:[#allocation2 + $0x398] sm:$0xff]
    %v172 = vld [vmem:[#allocation2 + $0x3a0] sm:$0xff]
    %v173 = vld [vmem:[#allocation2 + $0x3a8] sm:$0xff]
    %v174 = vld [vmem:[#allocation2 + $0x3b0] sm:$0xff]
    %v175 = vld [vmem:[#allocation2 + $0x3b8] sm:$0xff]
    %v176 = vld [vmem:[#allocation2 + $0x3c0] sm:$0xff]
    %v177 = vld [vmem:[#allocation2 + $0x3c8] sm:$0xff]
    %v178 = vld [vmem:[#allocation2 + $0x3d0] sm:$0xff]
    %v179 = vld [vmem:[#allocation2 + $0x3d8] sm:$0xff]
    %v180 = vld [vmem:[#allocation2 + $0x3e0] sm:$0xff]
    %v181 = vld [vmem:[#allocation2 + $0x3e8] sm:$0xff]
    %v182 = vld [vmem:[#allocation2 + $0x3f0] sm:$0xff]
    %v183 = vld [vmem:[#allocation2 + $0x3f8] sm:$0xff]
    %v184 = vld [vmem:[#allocation2 + $0x400] sm:$0xff]
    %v185 = vld [vmem:[#allocation2 + $0x408] sm:$0xff]
    %v186 = vld [vmem:[#allocation2 + $0x410] sm:$0xff]
    %v187 = vld [vmem:[#allocation2 + $0x418] sm:$0xff]
    %v188 = vld [vmem:[#allocation2 + $0x420] sm:$0xff]
    %v189 = vld [vmem:[#allocation2 + $0x428] sm:$0xff]
    %v190 = vld [vmem:[#allocation2 + $0x430] sm:$0xff]
    %v191 = vld [vmem:[#allocation2 + $0x438] sm:$0xff]
    %v192 = vld [vmem:[#allocation2 + $0x440] sm:$0xff]
    %v193 = vld [vmem:[#allocation2 + $0x448] sm:$0xff]
    %v194 = vld [vmem:[#allocation2 + $0x450] sm:$0xff]
    %v195 = vld [vmem:[#allocation2 + $0x458] sm:$0xff]
    %v196 = vld [vmem:[#allocation2 + $0x460] sm:$0xff]
    %v197 = vld [vmem:[#allocation2 + $0x468] sm:$0xff]
    %v198 = vld [vmem:[#allocation2 + $0x470] sm:$0xff]
    %v199 = vld [vmem:[#allocation2 + $0x478] sm:$0xff]
    %v200 = vld [vmem:[#allocation2 + $0x480] sm:$0xff]
    %v201 = vld [vmem:[#allocation2 + $0x488] sm:$0xff]
    %v202 = vld [vmem:[#allocation2 + $0x490] sm:$0xff]
    %v203 = vld [vmem:[#allocation2 + $0x498] sm:$0xff]
    %v204 = vld [vmem:[#allocation2 + $0x4a0] sm:$0xff]
    %v205 = vld [vmem:[#allocation2 + $0x4a8] sm:$0xff]
    %v206 = vld [vmem:[#allocation2 + $0x4b0] sm:$0xff]
    %v207 = vld [vmem:[#allocation2 + $0x4b8] sm:$0xff]
    %v208 = vld [vmem:[#allocation2 + $0x4c0] sm:$0xff]
    %v209 = vld [vmem:[#allocation2 + $0x4c8] sm:$0xff]
    %v210 = vld [vmem:[#allocation2 + $0x4d0] sm:$0xff]
    %v211 = vld [vmem:[#allocation2 + $0x4d8] sm:$0xff]
    %v212 = vld [vmem:[#allocation2 + $0x4e0] sm:$0xff]
    %v213 = vld [vmem:[#allocation2 + $0x4e8] sm:$0xff]
    %v214 = vld [vmem:[#allocation2 + $0x4f0] sm:$0xff]
    %v215 = vld [vmem:[#allocation2 + $0x4f8] sm:$0xff]
    %v216 = vld [vmem:[#allocation2 + $0x500] sm:$0xff]
    %v217 = vld [vmem:[#allocation2 + $0x508] sm:$0xff]
    %v218 = vld [vmem:[#allocation2 + $0x510] sm:$0xff]
    %v219 = vld [vmem:[#allocation2 + $0x518] sm:$0xff]
    %v220 = vld [vmem:[#allocation2 + $0x520] sm:$0xff]
    %v221 = vld [vmem:[#allocation2 + $0x528] sm:$0xff]
    %v222 = vld [vmem:[#allocation2 + $0x530] sm:$0xff]
    %v223 = vld [vmem:[#allocation2 + $0x538] sm:$0xff]
    %v224 = vld [vmem:[#allocation2 + $0x540] sm:$0xff]
    %v225 = vld [vmem:[#allocation2 + $0x548] sm:$0xff]
    %v226 = vld [vmem:[#allocation2 + $0x550] sm:$0xff]
    %v227 = vld [vmem:[#allocation2 + $0x558] sm:$0xff]
    %v228 = vld [vmem:[#allocation2 + $0x560] sm:$0xff]
    %v229 = vld [vmem:[#allocation2 + $0x568] sm:$0xff]
    %v230 = vld [vmem:[#allocation2 + $0x570] sm:$0xff]
    %v231 = vld [vmem:[#allocation2 + $0x578] sm:$0xff]
    %v232 = vld [vmem:[#allocation2 + $0x580] sm:$0xff]
    %v233 = vld [vmem:[#allocation2 + $0x588] sm:$0xff]
    %v234 = vld [vmem:[#allocation2 + $0x590] sm:$0xff]
    %v235 = vld [vmem:[#allocation2 + $0x598] sm:$0xff]
    %v236 = vld [vmem:[#allocation2 + $0x5a0] sm:$0xff]
    %v237 = vld [vmem:[#allocation2 + $0x5a8] sm:$0xff]
    %v238 = vld [vmem:[#allocation2 + $0x5b0] sm:$0xff]
    %v239 = vld [vmem:[#allocation2 + $0x5b8] sm:$0xff]
    %v240 = vld [vmem:[#allocation2 + $0x5c0] sm:$0xff]
    %v241 = vld [vmem:[#allocation2 + $0x5c8] sm:$0xff]
    %v242 = vld [vmem:[#allocation2 + $0x5d0] sm:$0xff]
    %v243 = vld [vmem:[#allocation2 + $0x5d8] sm:$0xff]
    %v244 = vld [vmem:[#allocation2 + $0x5e0] sm:$0xff]
    %v245 = vld [vmem:[#allocation2 + $0x5e8] sm:$0xff]
    %v246 = vld [vmem:[#allocation2 + $0x5f0] sm:$0xff]
    %v247 = vld [vmem:[#allocation2 + $0x5f8] sm:$0xff]
    %v248 = vld [vmem:[#allocation2 + $0x600] sm:$0xff]
    %v249 = vld [vmem:[#allocation2 + $0x608] sm:$0xff]
    %v250 = vld [vmem:[#allocation2 + $0x610] sm:$0xff]
    %v251 = vld [vmem:[#allocation2 + $0x618] sm:$0xff]
    %v260 = vunpack.c.l.b16 %v48
    %v261 = vunpack.c.h.b16 %v48
    %v262 = vunpack.c.l.b16 %v49
    %v263 = vunpack.c.h.b16 %v49
    %v264 = vunpack.c.l.b16 %v50
    %v265 = vunpack.c.h.b16 %v50
    %v266 = vunpack.c.l.b16 %v51
    %v267 = vunpack.c.l.b16 %v52
    %v268 = vunpack.c.h.b16 %v52
    %v269 = vunpack.c.l.b16 %v53
    %v270 = vunpack.c.h.b16 %v53
    %v271 = vunpack.c.l.b16 %v54
    %v272 = vunpack.c.h.b16 %v54
    %v273 = vunpack.c.l.b16 %v55
    %v274 = vpack.c.b16 %v267, %v260
    %v275 = vpack.c.b16 %v268, %v261
    %v276 = vpack.c.b16 %v269, %v262
    %v277 = vpack.c.b16 %v270, %v263
    %v278 = vpack.c.b16 %v271, %v264
    %v279 = vpack.c.b16 %v272, %v265
    %v280 = vpack.c.b16 %v273, %v266
    %v483 = vunpack.c.l.b16 %v56
    %v484 = vunpack.c.h.b16 %v56
    %v485 = vunpack.c.l.b16 %v57
    %v486 = vunpack.c.h.b16 %v57
    %v487 = vunpack.c.l.b16 %v58
    %v488 = vunpack.c.h.b16 %v58
    %v489 = vunpack.c.l.b16 %v59
    %v490 = vunpack.c.h.b16 %v59
    %v491 = vunpack.c.l.b16 %v60
    %v492 = vunpack.c.h.b16 %v60
    %v493 = vunpack.c.l.b16 %v61
    %v494 = vunpack.c.h.b16 %v61
    %v495 = vunpack.c.l.b16 %v62
    %v496 = vunpack.c.h.b16 %v62
    %v497 = vunpack.c.l.b16 %v63
    %v498 = vunpack.c.h.b16 %v63
    %v499 = vunpack.c.l.b16 %v64
    %v500 = vunpack.c.h.b16 %v64
    %v501 = vunpack.c.l.b16 %v65
    %v502 = vunpack.c.h.b16 %v65
    %v503 = vunpack.c.l.b16 %v66
    %v504 = vunpack.c.h.b16 %v66
    %v505 = vunpack.c.l.b16 %v67
    %v506 = vunpack.c.h.b16 %v67
    %v507 = vunpack.c.l.b16 %v68
    %v508 = vunpack.c.h.b16 %v68
    %v509 = vunpack.c.l.b16 %v69
    %v510 = vunpack.c.h.b16 %v69
    %v511 = vunpack.c.l.b16 %v70
    %v512 = vunpack.c.h.b16 %v70
    %v513 = vunpack.c.l.b16 %v71
    %v514 = vunpack.c.h.b16 %v71
    %v515 = vunpack.c.l.b16 %v72
    %v516 = vunpack.c.h.b16 %v72
    %v517 = vunpack.c.l.b16 %v73
    %v518 = vunpack.c.h.b16 %v73
    %v519 = vunpack.c.l.b16 %v74
    %v520 = vunpack.c.h.b16 %v74
    %v521 = vunpack.c.l.b16 %v75
    %v522 = vunpack.c.h.b16 %v75
    %v523 = vunpack.c.l.b16 %v76
    %v524 = vunpack.c.h.b16 %v76
    %v525 = vunpack.c.l.b16 %v77
    %v526 = vunpack.c.h.b16 %v77
    %v527 = vunpack.c.l.b16 %v78
    %v528 = vunpack.c.h.b16 %v78
    %v529 = vunpack.c.l.b16 %v79
    %v530 = vunpack.c.h.b16 %v79
    %v531 = vunpack.c.l.b16 %v80
    %v532 = vunpack.c.h.b16 %v80
    %v533 = vunpack.c.l.b16 %v81
    %v534 = vunpack.c.h.b16 %v81
    %v535 = vunpack.c.l.b16 %v82
    %v536 = vunpack.c.h.b16 %v82
    %v537 = vunpack.c.l.b16 %v83
    %v538 = vunpack.c.h.b16 %v83
    %v539 = vunpack.c.l.b16 %v84
    %v540 = vunpack.c.h.b16 %v84
    %v541 = vunpack.c.l.b16 %v85
    %v542 = vunpack.c.h.b16 %v85
    %v543 = vunpack.c.l.b16 %v86
    %v544 = vunpack.c.h.b16 %v86
    %v545 = vunpack.c.l.b16 %v87
    %v546 = vunpack.c.h.b16 %v87
    %v547 = vunpack.c.l.b16 %v88
    %v548 = vunpack.c.h.b16 %v88
    %v549 = vunpack.c.l.b16 %v89
    %v550 = vunpack.c.h.b16 %v89
    %v551 = vunpack.c.l.b16 %v90
    %v552 = vunpack.c.h.b16 %v90
    %v553 = vunpack.c.l.b16 %v91
    %v554 = vunpack.c.h.b16 %v91
    %v555 = vunpack.c.l.b16 %v92
    %v556 = vunpack.c.h.b16 %v92
    %v557 = vunpack.c.l.b16 %v93
    %v558 = vunpack.c.h.b16 %v93
    %v559 = vunpack.c.l.b16 %v94
    %v560 = vunpack.c.h.b16 %v94
    %v561 = vunpack.c.l.b16 %v95
    %v562 = vunpack.c.h.b16 %v95
    %v563 = vunpack.c.l.b16 %v96
    %v564 = vunpack.c.h.b16 %v96
    %v565 = vunpack.c.l.b16 %v97
    %v566 = vunpack.c.h.b16 %v97
    %v567 = vunpack.c.l.b16 %v98
    %v568 = vunpack.c.h.b16 %v98
    %v569 = vunpack.c.l.b16 %v99
    %v570 = vunpack.c.h.b16 %v99
    %v571 = vunpack.c.l.b16 %v100
    %v572 = vunpack.c.h.b16 %v100
    %v573 = vunpack.c.l.b16 %v101
    %v574 = vunpack.c.h.b16 %v101
    %v575 = vunpack.c.l.b16 %v102
    %v576 = vunpack.c.h.b16 %v102
    %v577 = vunpack.c.l.b16 %v103
    %v578 = vunpack.c.h.b16 %v103
    %v579 = vunpack.c.l.b16 %v104
    %v580 = vunpack.c.h.b16 %v104
    %v581 = vunpack.c.l.b16 %v105
    %v582 = vunpack.c.h.b16 %v105
    %v583 = vunpack.c.l.b16 %v106
    %v584 = vunpack.c.h.b16 %v106
    %v585 = vunpack.c.l.b16 %v107
    %v586 = vunpack.c.h.b16 %v107
    %v587 = vunpack.c.l.b16 %v108
    %v588 = vunpack.c.h.b16 %v108
    %v589 = vunpack.c.l.b16 %v109
    %v590 = vunpack.c.h.b16 %v109
    %v591 = vunpack.c.l.b16 %v110
    %v592 = vunpack.c.h.b16 %v110
    %v593 = vunpack.c.l.b16 %v111
    %v594 = vunpack.c.h.b16 %v111
    %v595 = vunpack.c.l.b16 %v112
    %v596 = vunpack.c.h.b16 %v112
    %v597 = vunpack.c.l.b16 %v113
    %v598 = vunpack.c.h.b16 %v113
    %v599 = vunpack.c.l.b16 %v114
    %v600 = vunpack.c.h.b16 %v114
    %v601 = vunpack.c.l.b16 %v115
    %v602 = vunpack.c.h.b16 %v115
    %v603 = vunpack.c.l.b16 %v116
    %v604 = vunpack.c.h.b16 %v116
    %v605 = vunpack.c.l.b16 %v117
    %v606 = vunpack.c.h.b16 %v117
    %v607 = vunpack.c.l.b16 %v118
    %v608 = vunpack.c.h.b16 %v118
    %v609 = vunpack.c.l.b16 %v119
    %v610 = vunpack.c.h.b16 %v119
    %v611 = vunpack.c.l.b16 %v120
    %v612 = vunpack.c.h.b16 %v120
    %v613 = vunpack.c.l.b16 %v121
    %v614 = vunpack.c.h.b16 %v121
    %v615 = vunpack.c.l.b16 %v122
    %v616 = vunpack.c.h.b16 %v122
    %v617 = vunpack.c.l.b16 %v123
    %v618 = vunpack.c.h.b16 %v123
    %v619 = vunpack.c.l.b16 %v124
    %v620 = vunpack.c.h.b16 %v124
    %v621 = vunpack.c.l.b16 %v125
    %v622 = vunpack.c.h.b16 %v125
    %v623 = vunpack.c.l.b16 %v126
    %v624 = vunpack.c.h.b16 %v126
    %v625 = vunpack.c.l.b16 %v127
    %v626 = vunpack.c.h.b16 %v127
    %v627 = vunpack.c.l.b16 %v128
    %v628 = vunpack.c.h.b16 %v128
    %v629 = vunpack.c.l.b16 %v129
    %v630 = vunpack.c.h.b16 %v129
    %v631 = vunpack.c.l.b16 %v130
    %v632 = vunpack.c.h.b16 %v130
    %v633 = vunpack.c.l.b16 %v131
    %v634 = vunpack.c.h.b16 %v131
    %v635 = vunpack.c.l.b16 %v132
    %v636 = vunpack.c.h.b16 %v132
    %v637 = vunpack.c.l.b16 %v133
    %v638 = vunpack.c.h.b16 %v133
    %v639 = vunpack.c.l.b16 %v134
    %v640 = vunpack.c.h.b16 %v134
    %v641 = vunpack.c.l.b16 %v135
    %v642 = vunpack.c.h.b16 %v135
    %v643 = vunpack.c.l.b16 %v136
    %v644 = vunpack.c.h.b16 %v136
    %v645 = vunpack.c.l.b16 %v137
    %v646 = vunpack.c.h.b16 %v137
    %v647 = vunpack.c.l.b16 %v138
    %v648 = vunpack.c.h.b16 %v138
    %v649 = vunpack.c.l.b16 %v139
    %v650 = vunpack.c.h.b16 %v139
    %v651 = vunpack.c.l.b16 %v140
    %v652 = vunpack.c.h.b16 %v140
    %v653 = vunpack.c.l.b16 %v141
    %v654 = vunpack.c.h.b16 %v141
    %v655 = vunpack.c.l.b16 %v142
    %v656 = vunpack.c.h.b16 %v142
    %v657 = vunpack.c.l.b16 %v143
    %v658 = vunpack.c.h.b16 %v143
    %v659 = vunpack.c.l.b16 %v144
    %v660 = vunpack.c.h.b16 %v144
    %v661 = vunpack.c.l.b16 %v145
    %v662 = vunpack.c.h.b16 %v145
    %v663 = vunpack.c.l.b16 %v146
    %v664 = vunpack.c.h.b16 %v146
    %v665 = vunpack.c.l.b16 %v147
    %v666 = vunpack.c.h.b16 %v147
    %v667 = vunpack.c.l.b16 %v148
    %v668 = vunpack.c.h.b16 %v148
    %v669 = vunpack.c.l.b16 %v149
    %v670 = vunpack.c.h.b16 %v149
    %v671 = vunpack.c.l.b16 %v150
    %v672 = vunpack.c.h.b16 %v150
    %v673 = vunpack.c.l.b16 %v151
    %v674 = vunpack.c.h.b16 %v151
    %v675 = vunpack.c.l.b16 %v152
    %v676 = vunpack.c.h.b16 %v152
    %v677 = vunpack.c.l.b16 %v153
    %v678 = vunpack.c.h.b16 %v153
    %v679 = vunpack.c.l.b16 %v154
    %v680 = vunpack.c.h.b16 %v154
    %v681 = vunpack.c.l.b16 %v155
    %v682 = vunpack.c.h.b16 %v155
    %v683 = vunpack.c.l.b16 %v156
    %v684 = vunpack.c.h.b16 %v156
    %v685 = vunpack.c.l.b16 %v157
    %v686 = vunpack.c.h.b16 %v157
    %v687 = vunpack.c.l.b16 %v158
    %v688 = vunpack.c.h.b16 %v158
    %v689 = vunpack.c.l.b16 %v159
    %v690 = vunpack.c.h.b16 %v159
    %v691 = vunpack.c.l.b16 %v160
    %v692 = vunpack.c.h.b16 %v160
    %v693 = vunpack.c.l.b16 %v161
    %v694 = vunpack.c.h.b16 %v161
    %v695 = vunpack.c.l.b16 %v162
    %v696 = vunpack.c.h.b16 %v162
    %v697 = vunpack.c.l.b16 %v163
    %v698 = vunpack.c.h.b16 %v163
    %v699 = vunpack.c.l.b16 %v164
    %v700 = vunpack.c.h.b16 %v164
    %v701 = vunpack.c.l.b16 %v165
    %v702 = vunpack.c.h.b16 %v165
    %v703 = vunpack.c.l.b16 %v166
    %v704 = vunpack.c.h.b16 %v166
    %v705 = vunpack.c.l.b16 %v167
    %v706 = vunpack.c.h.b16 %v167
    %v707 = vunpack.c.l.b16 %v168
    %v708 = vunpack.c.h.b16 %v168
    %v709 = vunpack.c.l.b16 %v169
    %v710 = vunpack.c.h.b16 %v169
    %v711 = vunpack.c.l.b16 %v170
    %v712 = vunpack.c.h.b16 %v170
    %v713 = vunpack.c.l.b16 %v171
    %v714 = vunpack.c.h.b16 %v171
    %v715 = vunpack.c.l.b16 %v172
    %v716 = vunpack.c.h.b16 %v172
    %v717 = vunpack.c.l.b16 %v173
    %v718 = vunpack.c.h.b16 %v173
    %v719 = vunpack.c.l.b16 %v174
    %v720 = vunpack.c.h.b16 %v174
    %v721 = vunpack.c.l.b16 %v175
    %v722 = vunpack.c.h.b16 %v175
    %v723 = vunpack.c.l.b16 %v176
    %v724 = vunpack.c.h.b16 %v176
    %v725 = vunpack.c.l.b16 %v177
    %v726 = vunpack.c.h.b16 %v177
    %v727 = vunpack.c.l.b16 %v178
    %v728 = vunpack.c.h.b16 %v178
    %v729 = vunpack.c.l.b16 %v179
    %v730 = vunpack.c.h.b16 %v179
    %v731 = vunpack.c.l.b16 %v180
    %v732 = vunpack.c.h.b16 %v180
    %v733 = vunpack.c.l.b16 %v181
    %v734 = vunpack.c.h.b16 %v181
    %v735 = vunpack.c.l.b16 %v182
    %v736 = vunpack.c.h.b16 %v182
    %v737 = vunpack.c.l.b16 %v183
    %v738 = vunpack.c.h.b16 %v183
    %v739 = vunpack.c.l.b16 %v184
    %v740 = vunpack.c.h.b16 %v184
    %v741 = vunpack.c.l.b16 %v185
    %v742 = vunpack.c.h.b16 %v185
    %v743 = vunpack.c.l.b16 %v186
    %v744 = vunpack.c.h.b16 %v186
    %v745 = vunpack.c.l.b16 %v187
    %v746 = vunpack.c.h.b16 %v187
    %v747 = vunpack.c.l.b16 %v188
    %v748 = vunpack.c.h.b16 %v188
    %v749 = vunpack.c.l.b16 %v189
    %v750 = vunpack.c.h.b16 %v189
    %v751 = vunpack.c.l.b16 %v190
    %v752 = vunpack.c.h.b16 %v190
    %v753 = vunpack.c.l.b16 %v191
    %v754 = vunpack.c.h.b16 %v191
    %v755 = vunpack.c.l.b16 %v192
    %v756 = vunpack.c.h.b16 %v192
    %v757 = vunpack.c.l.b16 %v193
    %v758 = vunpack.c.h.b16 %v193
    %v759 = vunpack.c.l.b16 %v194
    %v760 = vunpack.c.h.b16 %v194
    %v761 = vunpack.c.l.b16 %v195
    %v762 = vunpack.c.h.b16 %v195
    %v763 = vunpack.c.l.b16 %v196
    %v764 = vunpack.c.h.b16 %v196
    %v765 = vunpack.c.l.b16 %v197
    %v766 = vunpack.c.h.b16 %v197
    %v767 = vunpack.c.l.b16 %v198
    %v768 = vunpack.c.h.b16 %v198
    %v769 = vunpack.c.l.b16 %v199
    %v770 = vunpack.c.h.b16 %v199
    %v771 = vunpack.c.l.b16 %v200
    %v772 = vunpack.c.h.b16 %v200
    %v773 = vunpack.c.l.b16 %v201
    %v774 = vunpack.c.h.b16 %v201
    %v775 = vunpack.c.l.b16 %v202
    %v776 = vunpack.c.h.b16 %v202
    %v777 = vunpack.c.l.b16 %v203
    %v778 = vunpack.c.h.b16 %v203
    %v779 = vunpack.c.l.b16 %v204
    %v780 = vunpack.c.h.b16 %v204
    %v781 = vunpack.c.l.b16 %v205
    %v782 = vunpack.c.h.b16 %v205
    %v783 = vunpack.c.l.b16 %v206
    %v784 = vunpack.c.h.b16 %v206
    %v785 = vunpack.c.l.b16 %v207
    %v786 = vunpack.c.h.b16 %v207
    %v787 = vunpack.c.l.b16 %v208
    %v788 = vunpack.c.h.b16 %v208
    %v789 = vunpack.c.l.b16 %v209
    %v790 = vunpack.c.h.b16 %v209
    %v791 = vunpack.c.l.b16 %v210
    %v792 = vunpack.c.h.b16 %v210
    %v793 = vunpack.c.l.b16 %v211
    %v794 = vunpack.c.h.b16 %v211
    %v795 = vunpack.c.l.b16 %v212
    %v796 = vunpack.c.h.b16 %v212
    %v797 = vunpack.c.l.b16 %v213
    %v798 = vunpack.c.h.b16 %v213
    %v799 = vunpack.c.l.b16 %v214
    %v800 = vunpack.c.h.b16 %v214
    %v801 = vunpack.c.l.b16 %v215
    %v802 = vunpack.c.h.b16 %v215
    %v803 = vunpack.c.l.b16 %v216
    %v804 = vunpack.c.h.b16 %v216
    %v805 = vunpack.c.l.b16 %v217
    %v806 = vunpack.c.h.b16 %v217
    %v807 = vunpack.c.l.b16 %v218
    %v808 = vunpack.c.h.b16 %v218
    %v809 = vunpack.c.l.b16 %v219
    %v810 = vunpack.c.h.b16 %v219
    %v811 = vunpack.c.l.b16 %v220
    %v812 = vunpack.c.h.b16 %v220
    %v813 = vunpack.c.l.b16 %v221
    %v814 = vunpack.c.h.b16 %v221
    %v815 = vunpack.c.l.b16 %v222
    %v816 = vunpack.c.h.b16 %v222
    %v817 = vunpack.c.l.b16 %v223
    %v818 = vunpack.c.h.b16 %v223
    %v819 = vunpack.c.l.b16 %v224
    %v820 = vunpack.c.h.b16 %v224
    %v821 = vunpack.c.l.b16 %v225
    %v822 = vunpack.c.h.b16 %v225
    %v823 = vunpack.c.l.b16 %v226
    %v824 = vunpack.c.h.b16 %v226
    %v825 = vunpack.c.l.b16 %v227
    %v826 = vunpack.c.h.b16 %v227
    %v827 = vunpack.c.l.b16 %v228
    %v828 = vunpack.c.h.b16 %v228
    %v829 = vunpack.c.l.b16 %v229
    %v830 = vunpack.c.h.b16 %v229
    %v831 = vunpack.c.l.b16 %v230
    %v832 = vunpack.c.h.b16 %v230
    %v833 = vunpack.c.l.b16 %v231
    %v834 = vunpack.c.h.b16 %v231
    %v835 = vunpack.c.l.b16 %v232
    %v836 = vunpack.c.h.b16 %v232
    %v837 = vunpack.c.l.b16 %v233
    %v838 = vunpack.c.h.b16 %v233
    %v839 = vunpack.c.l.b16 %v234
    %v840 = vunpack.c.h.b16 %v234
    %v841 = vunpack.c.l.b16 %v235
    %v842 = vunpack.c.h.b16 %v235
    %v843 = vunpack.c.l.b16 %v236
    %v844 = vunpack.c.h.b16 %v236
    %v845 = vunpack.c.l.b16 %v237
    %v846 = vunpack.c.h.b16 %v237
    %v847 = vunpack.c.l.b16 %v238
    %v848 = vunpack.c.h.b16 %v238
    %v849 = vunpack.c.l.b16 %v239
    %v850 = vunpack.c.h.b16 %v239
    %v851 = vunpack.c.l.b16 %v240
    %v852 = vunpack.c.h.b16 %v240
    %v853 = vunpack.c.l.b16 %v241
    %v854 = vunpack.c.h.b16 %v241
    %v855 = vunpack.c.l.b16 %v242
    %v856 = vunpack.c.h.b16 %v242
    %v857 = vunpack.c.l.b16 %v243
    %v858 = vunpack.c.h.b16 %v243
    %v859 = vunpack.c.l.b16 %v244
    %v860 = vunpack.c.h.b16 %v244
    %v861 = vunpack.c.l.b16 %v245
    %v862 = vunpack.c.h.b16 %v245
    %v863 = vunpack.c.l.b16 %v246
    %v864 = vunpack.c.h.b16 %v246
    %v865 = vunpack.c.l.b16 %v247
    %v866 = vunpack.c.h.b16 %v247
    %v867 = vunpack.c.l.b16 %v248
    %v868 = vunpack.c.h.b16 %v248
    %v869 = vunpack.c.l.b16 %v249
    %v870 = vunpack.c.h.b16 %v249
    %v871 = vunpack.c.l.b16 %v250
    %v872 = vunpack.c.h.b16 %v250
    %v873 = vunpack.c.l.b16 %v251
    %v874 = vunpack.c.h.b16 %v251
    %v875 = vpack.c.b16 %v487, %v483
    %v876 = vpack.c.b16 %v488, %v484
    %v877 = vpack.c.b16 %v489, %v485
    %v878 = vpack.c.b16 %v490, %v486
    %v879 = vpack.c.b16 %v495, %v491
    %v880 = vpack.c.b16 %v496, %v492
    %v881 = vpack.c.b16 %v497, %v493
    %v882 = vpack.c.b16 %v498, %v494
    %v883 = vpack.c.b16 %v503, %v499
    %v884 = vpack.c.b16 %v504, %v500
    %v885 = vpack.c.b16 %v505, %v501
    %v886 = vpack.c.b16 %v506, %v502
    %v887 = vpack.c.b16 %v511, %v507
    %v888 = vpack.c.b16 %v512, %v508
    %v889 = vpack.c.b16 %v513, %v509
    %v890 = vpack.c.b16 %v514, %v510
    %v891 = vpack.c.b16 %v519, %v515
    %v892 = vpack.c.b16 %v520, %v516
    %v893 = vpack.c.b16 %v521, %v517
    %v894 = vpack.c.b16 %v522, %v518
    %v895 = vpack.c.b16 %v527, %v523
    %v896 = vpack.c.b16 %v528, %v524
    %v897 = vpack.c.b16 %v529, %v525
    %v898 = vpack.c.b16 %v530, %v526
    %v899 = vpack.c.b16 %v535, %v531
    %v900 = vpack.c.b16 %v536, %v532
    %v901 = vpack.c.b16 %v537, %v533
    %v902 = vpack.c.b16 %v538, %v534
    %v903 = vpack.c.b16 %v543, %v539
    %v904 = vpack.c.b16 %v544, %v540
    %v905 = vpack.c.b16 %v545, %v541
    %v906 = vpack.c.b16 %v546, %v542
    %v907 = vpack.c.b16 %v551, %v547
    %v908 = vpack.c.b16 %v552, %v548
    %v909 = vpack.c.b16 %v553, %v549
    %v910 = vpack.c.b16 %v554, %v550
    %v911 = vpack.c.b16 %v559, %v555
    %v912 = vpack.c.b16 %v560, %v556
    %v913 = vpack.c.b16 %v561, %v557
    %v914 = vpack.c.b16 %v562, %v558
    %v915 = vpack.c.b16 %v567, %v563
    %v916 = vpack.c.b16 %v568, %v564
    %v917 = vpack.c.b16 %v569, %v565
    %v918 = vpack.c.b16 %v570, %v566
    %v919 = vpack.c.b16 %v575, %v571
    %v920 = vpack.c.b16 %v576, %v572
    %v921 = vpack.c.b16 %v577, %v573
    %v922 = vpack.c.b16 %v578, %v574
    %v923 = vpack.c.b16 %v583, %v579
    %v924 = vpack.c.b16 %v584, %v580
    %v925 = vpack.c.b16 %v585, %v581
    %v926 = vpack.c.b16 %v586, %v582
    %v927 = vpack.c.b16 %v591, %v587
    %v928 = vpack.c.b16 %v592, %v588
    %v929 = vpack.c.b16 %v593, %v589
    %v930 = vpack.c.b16 %v594, %v590
    %v931 = vpack.c.b16 %v599, %v595
    %v932 = vpack.c.b16 %v600, %v596
    %v933 = vpack.c.b16 %v601, %v597
    %v934 = vpack.c.b16 %v602, %v598
    %v935 = vpack.c.b16 %v607, %v603
    %v936 = vpack.c.b16 %v608, %v604
    %v937 = vpack.c.b16 %v609, %v605
    %v938 = vpack.c.b16 %v610, %v606
    %v939 = vpack.c.b16 %v615, %v611
    %v940 = vpack.c.b16 %v616, %v612
    %v941 = vpack.c.b16 %v617, %v613
    %v942 = vpack.c.b16 %v618, %v614
    %v943 = vpack.c.b16 %v623, %v619
    %v944 = vpack.c.b16 %v624, %v620
    %v945 = vpack.c.b16 %v625, %v621
    %v946 = vpack.c.b16 %v626, %v622
    %v947 = vpack.c.b16 %v631, %v627
    %v948 = vpack.c.b16 %v632, %v628
    %v949 = vpack.c.b16 %v633, %v629
    %v950 = vpack.c.b16 %v634, %v630
    %v951 = vpack.c.b16 %v639, %v635
    %v952 = vpack.c.b16 %v640, %v636
    %v953 = vpack.c.b16 %v641, %v637
    %v954 = vpack.c.b16 %v642, %v638
    %v955 = vpack.c.b16 %v647, %v643
    %v956 = vpack.c.b16 %v648, %v644
    %v957 = vpack.c.b16 %v649, %v645
    %v958 = vpack.c.b16 %v650, %v646
    %v959 = vpack.c.b16 %v655, %v651
    %v960 = vpack.c.b16 %v656, %v652
    %v961 = vpack.c.b16 %v657, %v653
    %v962 = vpack.c.b16 %v658, %v654
    %v963 = vpack.c.b16 %v663, %v659
    %v964 = vpack.c.b16 %v664, %v660
    %v965 = vpack.c.b16 %v665, %v661
    %v966 = vpack.c.b16 %v666, %v662
    %v967 = vpack.c.b16 %v671, %v667
    %v968 = vpack.c.b16 %v672, %v668
    %v969 = vpack.c.b16 %v673, %v669
    %v970 = vpack.c.b16 %v674, %v670
    %v971 = vpack.c.b16 %v679, %v675
    %v972 = vpack.c.b16 %v680, %v676
    %v973 = vpack.c.b16 %v681, %v677
    %v974 = vpack.c.b16 %v682, %v678
    %v975 = vpack.c.b16 %v687, %v683
    %v976 = vpack.c.b16 %v688, %v684
    %v977 = vpack.c.b16 %v689, %v685
    %v978 = vpack.c.b16 %v690, %v686
    %v979 = vpack.c.b16 %v695, %v691
    %v980 = vpack.c.b16 %v696, %v692
    %v981 = vpack.c.b16 %v697, %v693
    %v982 = vpack.c.b16 %v698, %v694
    %v983 = vpack.c.b16 %v703, %v699
    %v984 = vpack.c.b16 %v704, %v700
    %v985 = vpack.c.b16 %v705, %v701
    %v986 = vpack.c.b16 %v706, %v702
    %v987 = vpack.c.b16 %v711, %v707
    %v988 = vpack.c.b16 %v712, %v708
    %v989 = vpack.c.b16 %v713, %v709
    %v990 = vpack.c.b16 %v714, %v710
    %v991 = vpack.c.b16 %v719, %v715
    %v992 = vpack.c.b16 %v720, %v716
    %v993 = vpack.c.b16 %v721, %v717
    %v994 = vpack.c.b16 %v722, %v718
    %v995 = vpack.c.b16 %v727, %v723
    %v996 = vpack.c.b16 %v728, %v724
    %v997 = vpack.c.b16 %v729, %v725
    %v998 = vpack.c.b16 %v730, %v726
    %v999 = vpack.c.b16 %v735, %v731
    %v1000 = vpack.c.b16 %v736, %v732
    %v1001 = vpack.c.b16 %v737, %v733
    %v1002 = vpack.c.b16 %v738, %v734
    %v1003 = vpack.c.b16 %v743, %v739
    %v1004 = vpack.c.b16 %v744, %v740
    %v1005 = vpack.c.b16 %v745, %v741
    %v1006 = vpack.c.b16 %v746, %v742
    %v1007 = vpack.c.b16 %v751, %v747
    %v1008 = vpack.c.b16 %v752, %v748
    %v1009 = vpack.c.b16 %v753, %v749
    %v1010 = vpack.c.b16 %v754, %v750
    %v1011 = vpack.c.b16 %v759, %v755
    %v1012 = vpack.c.b16 %v760, %v756
    %v1013 = vpack.c.b16 %v761, %v757
    %v1014 = vpack.c.b16 %v762, %v758
    %v1015 = vpack.c.b16 %v767, %v763
    %v1016 = vpack.c.b16 %v768, %v764
    %v1017 = vpack.c.b16 %v769, %v765
    %v1018 = vpack.c.b16 %v770, %v766
    %v1019 = vpack.c.b16 %v775, %v771
    %v1020 = vpack.c.b16 %v776, %v772
    %v1021 = vpack.c.b16 %v777, %v773
    %v1022 = vpack.c.b16 %v778, %v774
    %v1023 = vpack.c.b16 %v783, %v779
    %v1024 = vpack.c.b16 %v784, %v780
    %v1025 = vpack.c.b16 %v785, %v781
    %v1026 = vpack.c.b16 %v786, %v782
    %v1027 = vpack.c.b16 %v791, %v787
    %v1028 = vpack.c.b16 %v792, %v788
    %v1029 = vpack.c.b16 %v793, %v789
    %v1030 = vpack.c.b16 %v794, %v790
    %v1031 = vpack.c.b16 %v799, %v795
    %v1032 = vpack.c.b16 %v800, %v796
    %v1033 = vpack.c.b16 %v801, %v797
    %v1034 = vpack.c.b16 %v802, %v798
    %v1035 = vpack.c.b16 %v807, %v803
    %v1036 = vpack.c.b16 %v808, %v804
    %v1037 = vpack.c.b16 %v809, %v805
    %v1038 = vpack.c.b16 %v810, %v806
    %v1039 = vpack.c.b16 %v815, %v811
    %v1040 = vpack.c.b16 %v816, %v812
    %v1041 = vpack.c.b16 %v817, %v813
    %v1042 = vpack.c.b16 %v818, %v814
    %v1043 = vpack.c.b16 %v823, %v819
    %v1044 = vpack.c.b16 %v824, %v820
    %v1045 = vpack.c.b16 %v825, %v821
    %v1046 = vpack.c.b16 %v826, %v822
    %v1047 = vpack.c.b16 %v831, %v827
    %v1048 = vpack.c.b16 %v832, %v828
    %v1049 = vpack.c.b16 %v833, %v829
    %v1050 = vpack.c.b16 %v834, %v830
    %v1051 = vpack.c.b16 %v839, %v835
    %v1052 = vpack.c.b16 %v840, %v836
    %v1053 = vpack.c.b16 %v841, %v837
    %v1054 = vpack.c.b16 %v842, %v838
    %v1055 = vpack.c.b16 %v847, %v843
    %v1056 = vpack.c.b16 %v848, %v844
    %v1057 = vpack.c.b16 %v849, %v845
    %v1058 = vpack.c.b16 %v850, %v846
    %v1059 = vpack.c.b16 %v855, %v851
    %v1060 = vpack.c.b16 %v856, %v852
    %v1061 = vpack.c.b16 %v857, %v853
    %v1062 = vpack.c.b16 %v858, %v854
    %v1063 = vpack.c.b16 %v863, %v859
    %v1064 = vpack.c.b16 %v864, %v860
    %v1065 = vpack.c.b16 %v865, %v861
    %v1066 = vpack.c.b16 %v866, %v862
    %v1067 = vpack.c.b16 %v871, %v867
    %v1068 = vpack.c.b16 %v872, %v868
    %v1069 = vpack.c.b16 %v873, %v869
    %v1070 = vpack.c.b16 %v874, %v870
    %vm1267 = vcmask 130048
    %v1269 = vsel %vm1267, %v280, 0
    %1271 = vmatprep.subr.bf16.mxu0 %v904
    %1272 = vmatpush1.bf16.msra.mxu0 %v903
    %1273 = vmatprep.subr.bf16.mxu0 %v900
    %1274 = vmatpush1.bf16.msra.mxu0 %v899
    %1275 = vmatprep.subr.bf16.mxu0 %v896
    %1276 = vmatpush1.bf16.msra.mxu0 %v895
    %1277 = vmatprep.subr.bf16.mxu0 %v892
    %1278 = vmatpush1.bf16.msra.mxu0 %v891
    %1279 = vmatprep.subr.bf16.mxu0 %v888
    %1280 = vmatpush1.bf16.msra.mxu0 %v887
    %1281 = vmatprep.subr.bf16.mxu0 %v884
    %1282 = vmatpush1.bf16.msra.mxu0 %v883
    %1283 = vmatprep.subr.bf16.mxu0 %v880
    %1284 = vmatpush1.bf16.msra.mxu0 %v879
    %1285 = vmatprep.subr.bf16.mxu0 %v876
    %1286 = vmatpush1.bf16.msra.mxu0 %v875
    %1287 = vmatprep.subr.bf16.mxu0 %v936
    %1288 = vmatpush2.bf16.msra.mxu0 %v935
    %1289 = vmatprep.subr.bf16.mxu0 %v932
    %1290 = vmatpush2.bf16.msra.mxu0 %v931
    %1291 = vmatprep.subr.bf16.mxu0 %v928
    %1292 = vmatpush2.bf16.msra.mxu0 %v927
    %1293 = vmatprep.subr.bf16.mxu0 %v924
    %1294 = vmatpush2.bf16.msra.mxu0 %v923
    %1295 = vmatprep.subr.bf16.mxu0 %v920
    %1296 = vmatpush2.bf16.msra.mxu0 %v919
    %1297 = vmatprep.subr.bf16.mxu0 %v916
    %1298 = vmatpush2.bf16.msra.mxu0 %v915
    %1299 = vmatprep.subr.bf16.mxu0 %v912
    %1300 = vmatpush2.bf16.msra.mxu0 %v911
    %1301 = vmatprep.subr.bf16.mxu0 %v908
    %1302 = vmatpush2.bf16.msra.mxu0 %v907
    %1303 = vmatprep.mubr.bf16.mxu0 %v275
    %1304 = vmatmul.mubr.bf16.gmra.mxu0 %v274
    %v1305 = vpop.f32.mrf.mxu0
    %v1306 = vadd.f32 0.0, %v1305
    %v1307 = vpop.f32.mrf.mxu0
    %v1308 = vadd.f32 0.0, %v1307
    %v1309 = vpop.f32.mrf.mxu0
    %v1310 = vadd.f32 0.0, %v1309
    %v1311 = vpop.f32.mrf.mxu0
    %v1312 = vadd.f32 0.0, %v1311
    %1313 = vdwg.mxu0
    %1314 = vmatprep.subr.bf16.mxu0 %v968
    %1315 = vmatpush1.bf16.msra.mxu0 %v967
    %1316 = vmatprep.subr.bf16.mxu0 %v964
    %1317 = vmatpush1.bf16.msra.mxu0 %v963
    %1318 = vmatprep.subr.bf16.mxu0 %v960
    %1319 = vmatpush1.bf16.msra.mxu0 %v959
    %1320 = vmatprep.subr.bf16.mxu0 %v956
    %1321 = vmatpush1.bf16.msra.mxu0 %v955
    %1322 = vmatprep.subr.bf16.mxu0 %v952
    %1323 = vmatpush1.bf16.msra.mxu0 %v951
    %1324 = vmatprep.subr.bf16.mxu0 %v948
    %1325 = vmatpush1.bf16.msra.mxu0 %v947
    %1326 = vmatprep.subr.bf16.mxu0 %v944
    %1327 = vmatpush1.bf16.msra.mxu0 %v943
    %1328 = vmatprep.subr.bf16.mxu0 %v940
    %1329 = vmatpush1.bf16.msra.mxu0 %v939
    %1330 = vmatprep.subr.bf16.mxu0 %v1000
    %1331 = vmatpush2.bf16.msra.mxu0 %v999
    %1332 = vmatprep.subr.bf16.mxu0 %v996
    %1333 = vmatpush2.bf16.msra.mxu0 %v995
    %1334 = vmatprep.subr.bf16.mxu0 %v992
    %1335 = vmatpush2.bf16.msra.mxu0 %v991
    %1336 = vmatprep.subr.bf16.mxu0 %v988
    %1337 = vmatpush2.bf16.msra.mxu0 %v987
    %1338 = vmatprep.subr.bf16.mxu0 %v984
    %1339 = vmatpush2.bf16.msra.mxu0 %v983
    %1340 = vmatprep.subr.bf16.mxu0 %v980
    %1341 = vmatpush2.bf16.msra.mxu0 %v979
    %1342 = vmatprep.subr.bf16.mxu0 %v976
    %1343 = vmatpush2.bf16.msra.mxu0 %v975
    %1344 = vmatprep.subr.bf16.mxu0 %v972
    %1345 = vmatpush2.bf16.msra.mxu0 %v971
    %1346 = vmatprep.mubr.bf16.mxu0 %v277
    %1347 = vmatmul.mubr.bf16.gmra.mxu0 %v276
    %v1348 = vpop.f32.mrf.mxu0
    %v1349 = vadd.f32 %v1306, %v1348
    %v1350 = vpop.f32.mrf.mxu0
    %v1351 = vadd.f32 %v1308, %v1350
    %v1352 = vpop.f32.mrf.mxu0
    %v1353 = vadd.f32 %v1310, %v1352
    %v1354 = vpop.f32.mrf.mxu0
    %v1355 = vadd.f32 %v1312, %v1354
    %1356 = vdwg.mxu0
    %1357 = vmatprep.subr.bf16.mxu0 %v1032
    %1358 = vmatpush1.bf16.msra.mxu0 %v1031
    %1359 = vmatprep.subr.bf16.mxu0 %v1028
    %1360 = vmatpush1.bf16.msra.mxu0 %v1027
    %1361 = vmatprep.subr.bf16.mxu0 %v1024
    %1362 = vmatpush1.bf16.msra.mxu0 %v1023
    %1363 = vmatprep.subr.bf16.mxu0 %v1020
    %1364 = vmatpush1.bf16.msra.mxu0 %v1019
    %1365 = vmatprep.subr.bf16.mxu0 %v1016
    %1366 = vmatpush1.bf16.msra.mxu0 %v1015
    %1367 = vmatprep.subr.bf16.mxu0 %v1012
    %1368 = vmatpush1.bf16.msra.mxu0 %v1011
    %1369 = vmatprep.subr.bf16.mxu0 %v1008
    %1370 = vmatpush1.bf16.msra.mxu0 %v1007
    %1371 = vmatprep.subr.bf16.mxu0 %v1004
    %1372 = vmatpush1.bf16.msra.mxu0 %v1003
    %1373 = vmatprep.subr.bf16.mxu0 %v1064
    %1374 = vmatpush2.bf16.msra.mxu0 %v1063
    %1375 = vmatprep.subr.bf16.mxu0 %v1060
    %1376 = vmatpush2.bf16.msra.mxu0 %v1059
    %1377 = vmatprep.subr.bf16.mxu0 %v1056
    %1378 = vmatpush2.bf16.msra.mxu0 %v1055
    %1379 = vmatprep.subr.bf16.mxu0 %v1052
    %1380 = vmatpush2.bf16.msra.mxu0 %v1051
    %1381 = vmatprep.subr.bf16.mxu0 %v1048
    %1382 = vmatpush2.bf16.msra.mxu0 %v1047
    %1383 = vmatprep.subr.bf16.mxu0 %v1044
    %1384 = vmatpush2.bf16.msra.mxu0 %v1043
    %1385 = vmatprep.subr.bf16.mxu0 %v1040
    %1386 = vmatpush2.bf16.msra.mxu0 %v1039
    %1387 = vmatprep.subr.bf16.mxu0 %v1036
    %1388 = vmatpush2.bf16.msra.mxu0 %v1035
    %1389 = vmatprep.mubr.bf16.mxu0 %v279
    %1390 = vmatmul.mubr.bf16.gmra.mxu0 %v278
    %v1391 = vpop.f32.mrf.mxu0
    %v1392 = vadd.f32 %v1349, %v1391
    %v1393 = vpop.f32.mrf.mxu0
    %v1394 = vadd.f32 %v1351, %v1393
    %v1395 = vpop.f32.mrf.mxu0
    %v1396 = vadd.f32 %v1353, %v1395
    %v1397 = vpop.f32.mrf.mxu0
    %v1398 = vadd.f32 %v1355, %v1397
    %1399 = vdwg.mxu0
    %1400 = vmatprep.subr.bf16.mxu0 0
    %1401 = vmatpush1.bf16.msra.mxu0 0
    %1402 = vmatprep.subr.bf16.mxu0 0
    %1403 = vmatpush1.bf16.msra.mxu0 0
    %1404 = vmatprep.subr.bf16.mxu0 0
    %1405 = vmatpush1.bf16.msra.mxu0 0
    %1406 = vmatprep.subr.bf16.mxu0 0
    %1407 = vmatpush1.bf16.msra.mxu0 0
    %1408 = vmatprep.subr.bf16.mxu0 0
    %1409 = vmatpush1.bf16.msra.mxu0 0
    %1410 = vmatprep.subr.bf16.mxu0 0
    %1411 = vmatpush1.bf16.msra.mxu0 0
    %1412 = vmatprep.subr.bf16.mxu0 0
    %1413 = vmatpush1.bf16.msra.mxu0 0
    %1414 = vmatprep.subr.bf16.mxu0 %v1068
    %1415 = vmatpush1.bf16.msra.mxu0 %v1067
    %1416 = vmatprep.subr.bf16.mxu0 0
    %1417 = vmatpush2.bf16.msra.mxu0 0
    %1418 = vmatprep.subr.bf16.mxu0 0
    %1419 = vmatpush2.bf16.msra.mxu0 0
    %1420 = vmatprep.subr.bf16.mxu0 0
    %1421 = vmatpush2.bf16.msra.mxu0 0
    %1422 = vmatprep.subr.bf16.mxu0 0
    %1423 = vmatpush2.bf16.msra.mxu0 0
    %1424 = vmatprep.subr.bf16.mxu0 0
    %1425 = vmatpush2.bf16.msra.mxu0 0
    %1426 = vmatprep.subr.bf16.mxu0 0
    %1427 = vmatpush2.bf16.msra.mxu0 0
    %1428 = vmatprep.subr.bf16.mxu0 0
    %1429 = vmatpush2.bf16.msra.mxu0 0
    %1430 = vmatprep.subr.bf16.mxu0 0
    %1431 = vmatpush2.bf16.msra.mxu0 0
    %1432 = vmatprep.mubr.bf16.mxu0 0
    %1433 = vmatmul.mubr.bf16.gmra.mxu0 %v1269
    %v1434 = vpop.f32.mrf.mxu0
    %v1435 = vadd.f32 %v1392, %v1434
    %v1436 = vpop.f32.mrf.mxu0
    %v1437 = vadd.f32 %v1394, %v1436
    %v1438 = vpop.f32.mrf.mxu0
    %v1439 = vadd.f32 %v1396, %v1438
    %v1440 = vpop.f32.mrf.mxu0
    %v1441 = vadd.f32 %v1398, %v1440
    %1442 = vdwg.mxu0
    %1443 = vmatprep.subr.bf16.mxu0 %v906
    %1444 = vmatpush1.bf16.msra.mxu0 %v905
    %1445 = vmatprep.subr.bf16.mxu0 %v902
    %1446 = vmatpush1.bf16.msra.mxu0 %v901
    %1447 = vmatprep.subr.bf16.mxu0 %v898
    %1448 = vmatpush1.bf16.msra.mxu0 %v897
    %1449 = vmatprep.subr.bf16.mxu0 %v894
    %1450 = vmatpush1.bf16.msra.mxu0 %v893
    %1451 = vmatprep.subr.bf16.mxu0 %v890
    %1452 = vmatpush1.bf16.msra.mxu0 %v889
    %1453 = vmatprep.subr.bf16.mxu0 %v886
    %1454 = vmatpush1.bf16.msra.mxu0 %v885
    %1455 = vmatprep.subr.bf16.mxu0 %v882
    %1456 = vmatpush1.bf16.msra.mxu0 %v881
    %1457 = vmatprep.subr.bf16.mxu0 %v878
    %1458 = vmatpush1.bf16.msra.mxu0 %v877
    %1459 = vmatprep.subr.bf16.mxu0 %v938
    %1460 = vmatpush2.bf16.msra.mxu0 %v937
    %1461 = vmatprep.subr.bf16.mxu0 %v934
    %1462 = vmatpush2.bf16.msra.mxu0 %v933
    %1463 = vmatprep.subr.bf16.mxu0 %v930
    %1464 = vmatpush2.bf16.msra.mxu0 %v929
    %1465 = vmatprep.subr.bf16.mxu0 %v926
    %1466 = vmatpush2.bf16.msra.mxu0 %v925
    %1467 = vmatprep.subr.bf16.mxu0 %v922
    %1468 = vmatpush2.bf16.msra.mxu0 %v921
    %1469 = vmatprep.subr.bf16.mxu0 %v918
    %1470 = vmatpush2.bf16.msra.mxu0 %v917
    %1471 = vmatprep.subr.bf16.mxu0 %v914
    %1472 = vmatpush2.bf16.msra.mxu0 %v913
    %1473 = vmatprep.subr.bf16.mxu0 %v910
    %1474 = vmatpush2.bf16.msra.mxu0 %v909
    %1475 = vmatprep.mubr.bf16.mxu0 %v275
    %1476 = vmatmul.mubr.bf16.gmra.mxu0 %v274
    %v1477 = vpop.f32.mrf.mxu0
    %v1478 = vadd.f32 0.0, %v1477
    %v1479 = vpop.f32.mrf.mxu0
    %v1480 = vadd.f32 0.0, %v1479
    %v1481 = vpop.f32.mrf.mxu0
    %v1482 = vadd.f32 0.0, %v1481
    %v1483 = vpop.f32.mrf.mxu0
    %v1484 = vadd.f32 0.0, %v1483
    %1485 = vdwg.mxu0
    %1486 = vmatprep.subr.bf16.mxu0 %v970
    %1487 = vmatpush1.bf16.msra.mxu0 %v969
    %1488 = vmatprep.subr.bf16.mxu0 %v966
    %1489 = vmatpush1.bf16.msra.mxu0 %v965
    %1490 = vmatprep.subr.bf16.mxu0 %v962
    %1491 = vmatpush1.bf16.msra.mxu0 %v961
    %1492 = vmatprep.subr.bf16.mxu0 %v958
    %1493 = vmatpush1.bf16.msra.mxu0 %v957
    %1494 = vmatprep.subr.bf16.mxu0 %v954
    %1495 = vmatpush1.bf16.msra.mxu0 %v953
    %1496 = vmatprep.subr.bf16.mxu0 %v950
    %1497 = vmatpush1.bf16.msra.mxu0 %v949
    %1498 = vmatprep.subr.bf16.mxu0 %v946
    %1499 = vmatpush1.bf16.msra.mxu0 %v945
    %1500 = vmatprep.subr.bf16.mxu0 %v942
    %1501 = vmatpush1.bf16.msra.mxu0 %v941
    %1502 = vmatprep.subr.bf16.mxu0 %v1002
    %1503 = vmatpush2.bf16.msra.mxu0 %v1001
    %1504 = vmatprep.subr.bf16.mxu0 %v998
    %1505 = vmatpush2.bf16.msra.mxu0 %v997
    %1506 = vmatprep.subr.bf16.mxu0 %v994
    %1507 = vmatpush2.bf16.msra.mxu0 %v993
    %1508 = vmatprep.subr.bf16.mxu0 %v990
    %1509 = vmatpush2.bf16.msra.mxu0 %v989
    %1510 = vmatprep.subr.bf16.mxu0 %v986
    %1511 = vmatpush2.bf16.msra.mxu0 %v985
    %1512 = vmatprep.subr.bf16.mxu0 %v982
    %1513 = vmatpush2.bf16.msra.mxu0 %v981
    %1514 = vmatprep.subr.bf16.mxu0 %v978
    %1515 = vmatpush2.bf16.msra.mxu0 %v977
    %1516 = vmatprep.subr.bf16.mxu0 %v974
    %1517 = vmatpush2.bf16.msra.mxu0 %v973
    %1518 = vmatprep.mubr.bf16.mxu0 %v277
    %1519 = vmatmul.mubr.bf16.gmra.mxu0 %v276
    %v1520 = vpop.f32.mrf.mxu0
    %v1521 = vadd.f32 %v1478, %v1520
    %v1522 = vpop.f32.mrf.mxu0
    %v1523 = vadd.f32 %v1480, %v1522
    %v1524 = vpop.f32.mrf.mxu0
    %v1525 = vadd.f32 %v1482, %v1524
    %v1526 = vpop.f32.mrf.mxu0
    %v1527 = vadd.f32 %v1484, %v1526
    %1528 = vdwg.mxu0
    %1529 = vmatprep.subr.bf16.mxu0 %v1034
    %1530 = vmatpush1.bf16.msra.mxu0 %v1033
    %1531 = vmatprep.subr.bf16.mxu0 %v1030
    %1532 = vmatpush1.bf16.msra.mxu0 %v1029
    %1533 = vmatprep.subr.bf16.mxu0 %v1026
    %1534 = vmatpush1.bf16.msra.mxu0 %v1025
    %1535 = vmatprep.subr.bf16.mxu0 %v1022
    %1536 = vmatpush1.bf16.msra.mxu0 %v1021
    %1537 = vmatprep.subr.bf16.mxu0 %v1018
    %1538 = vmatpush1.bf16.msra.mxu0 %v1017
    %1539 = vmatprep.subr.bf16.mxu0 %v1014
    %1540 = vmatpush1.bf16.msra.mxu0 %v1013
    %1541 = vmatprep.subr.bf16.mxu0 %v1010
    %1542 = vmatpush1.bf16.msra.mxu0 %v1009
    %1543 = vmatprep.subr.bf16.mxu0 %v1006
    %1544 = vmatpush1.bf16.msra.mxu0 %v1005
    %1545 = vmatprep.subr.bf16.mxu0 %v1066
    %1546 = vmatpush2.bf16.msra.mxu0 %v1065
    %1547 = vmatprep.subr.bf16.mxu0 %v1062
    %1548 = vmatpush2.bf16.msra.mxu0 %v1061
    %1549 = vmatprep.subr.bf16.mxu0 %v1058
    %1550 = vmatpush2.bf16.msra.mxu0 %v1057
    %1551 = vmatprep.subr.bf16.mxu0 %v1054
    %1552 = vmatpush2.bf16.msra.mxu0 %v1053
    %1553 = vmatprep.subr.bf16.mxu0 %v1050
    %1554 = vmatpush2.bf16.msra.mxu0 %v1049
    %1555 = vmatprep.subr.bf16.mxu0 %v1046
    %1556 = vmatpush2.bf16.msra.mxu0 %v1045
    %1557 = vmatprep.subr.bf16.mxu0 %v1042
    %1558 = vmatpush2.bf16.msra.mxu0 %v1041
    %1559 = vmatprep.subr.bf16.mxu0 %v1038
    %1560 = vmatpush2.bf16.msra.mxu0 %v1037
    %1561 = vmatprep.mubr.bf16.mxu0 %v279
    %1562 = vmatmul.mubr.bf16.gmra.mxu0 %v278
    %v1563 = vpop.f32.mrf.mxu0
    %v1564 = vadd.f32 %v1521, %v1563
    %v1565 = vpop.f32.mrf.mxu0
    %v1566 = vadd.f32 %v1523, %v1565
    %v1567 = vpop.f32.mrf.mxu0
    %v1568 = vadd.f32 %v1525, %v1567
    %v1569 = vpop.f32.mrf.mxu0
    %v1570 = vadd.f32 %v1527, %v1569
    %1571 = vdwg.mxu0
    %1572 = vmatprep.subr.bf16.mxu0 0
    %1573 = vmatpush1.bf16.msra.mxu0 0
    %1574 = vmatprep.subr.bf16.mxu0 0
    %1575 = vmatpush1.bf16.msra.mxu0 0
    %1576 = vmatprep.subr.bf16.mxu0 0
    %1577 = vmatpush1.bf16.msra.mxu0 0
    %1578 = vmatprep.subr.bf16.mxu0 0
    %1579 = vmatpush1.bf16.msra.mxu0 0
    %1580 = vmatprep.subr.bf16.mxu0 0
    %1581 = vmatpush1.bf16.msra.mxu0 0
    %1582 = vmatprep.subr.bf16.mxu0 0
    %1583 = vmatpush1.bf16.msra.mxu0 0
    %1584 = vmatprep.subr.bf16.mxu0 0
    %1585 = vmatpush1.bf16.msra.mxu0 0
    %1586 = vmatprep.subr.bf16.mxu0 %v1070
    %1587 = vmatpush1.bf16.msra.mxu0 %v1069
    %1588 = vmatprep.subr.bf16.mxu0 0
    %1589 = vmatpush2.bf16.msra.mxu0 0
    %1590 = vmatprep.subr.bf16.mxu0 0
    %1591 = vmatpush2.bf16.msra.mxu0 0
    %1592 = vmatprep.subr.bf16.mxu0 0
    %1593 = vmatpush2.bf16.msra.mxu0 0
    %1594 = vmatprep.subr.bf16.mxu0 0
    %1595 = vmatpush2.bf16.msra.mxu0 0
    %1596 = vmatprep.subr.bf16.mxu0 0
    %1597 = vmatpush2.bf16.msra.mxu0 0
    %1598 = vmatprep.subr.bf16.mxu0 0
    %1599 = vmatpush2.bf16.msra.mxu0 0
    %1600 = vmatprep.subr.bf16.mxu0 0
    %1601 = vmatpush2.bf16.msra.mxu0 0
    %1602 = vmatprep.subr.bf16.mxu0 0
    %1603 = vmatpush2.bf16.msra.mxu0 0
    %1604 = vmatprep.mubr.bf16.mxu0 0
    %1605 = vmatmul.mubr.bf16.gmra.mxu0 %v1269
    %v1606 = vpop.f32.mrf.mxu0
    %v1607 = vadd.f32 %v1564, %v1606
    %v1608 = vpop.f32.mrf.mxu0
    %v1609 = vadd.f32 %v1566, %v1608
    %v1610 = vpop.f32.mrf.mxu0
    %v1611 = vadd.f32 %v1568, %v1610
    %v1612 = vpop.f32.mrf.mxu0
    %v1613 = vadd.f32 %v1570, %v1612
    %1614 = vdwg.mxu0
    %v1615 = vld [vmem:[%s2] sm:$0xf]
    %v1616 = vld [vmem:[%s3] sm:$0xf]
    %v1617 = vadd.f32 %v1435, %v1439
    %v1618 = vrot.slane %v1617, 4
    %v1619 = vadd.f32 %v1617, %v1618
    %v1620 = vrot.slane %v1619, 2
    %v1621 = vadd.f32 %v1619, %v1620
    %v1622 = vrot.slane %v1621, 1
    %v1623 = vadd.f32 %v1621, %v1622
    %v1624 = vadd.f32 %v1437, %v1441
    %v1625 = vrot.slane %v1624, 4
    %v1626 = vadd.f32 %v1624, %v1625
    %v1627 = vrot.slane %v1626, 2
    %v1628 = vadd.f32 %v1626, %v1627
    %v1629 = vrot.slane %v1628, 1
    %v1630 = vadd.f32 %v1628, %v1629
    %v1631 = vadd.f32 %v1607, %v1611
    %v1632 = vrot.slane %v1631, 4
    %v1633 = vadd.f32 %v1631, %v1632
    %v1634 = vrot.slane %v1633, 2
    %v1635 = vadd.f32 %v1633, %v1634
    %v1636 = vrot.slane %v1635, 1
    %v1637 = vadd.f32 %v1635, %v1636
    %v1638 = vadd.f32 %v1609, %v1613
    %v1639 = vrot.slane %v1638, 4
    %v1640 = vadd.f32 %v1638, %v1639
    %v1641 = vrot.slane %v1640, 2
    %v1642 = vadd.f32 %v1640, %v1641
    %v1643 = vrot.slane %v1642, 1
    %v1644 = vadd.f32 %v1642, %v1643
    %v1645 = vrcp.pop 16.0
    %v1646 = vmul.f32 %v1623, %v1645
    %v1647 = vmul.f32 %v1630, %v1645
    %v1648 = vmul.f32 %v1637, %v1645
    %v1649 = vmul.f32 %v1644, %v1645
    %v1650 = vsub.f32 %v1435, %v1646
    %v1651 = vsub.f32 %v1437, %v1647
    %v1652 = vsub.f32 %v1607, %v1648
    %v1653 = vsub.f32 %v1609, %v1649
    %v1654 = vsub.f32 %v1439, %v1646
    %v1655 = vsub.f32 %v1441, %v1647
    %v1656 = vsub.f32 %v1611, %v1648
    %v1657 = vsub.f32 %v1613, %v1649
    %v1658 = vmul.f32 %v1650, %v1650
    %v1659 = vmul.f32 %v1651, %v1651
    %v1660 = vmul.f32 %v1652, %v1652
    %v1661 = vmul.f32 %v1653, %v1653
    %v1662 = vmul.f32 %v1654, %v1654
    %v1663 = vmul.f32 %v1655, %v1655
    %v1664 = vmul.f32 %v1656, %v1656
    %v1665 = vmul.f32 %v1657, %v1657
    %v1666 = vadd.f32 %v1658, %v1662
    %v1667 = vrot.slane %v1666, 4
    %v1668 = vadd.f32 %v1666, %v1667
    %v1669 = vrot.slane %v1668, 2
    %v1670 = vadd.f32 %v1668, %v1669
    %v1671 = vrot.slane %v1670, 1
    %v1672 = vadd.f32 %v1670, %v1671
    %v1673 = vadd.f32 %v1659, %v1663
    %v1674 = vrot.slane %v1673, 4
    %v1675 = vadd.f32 %v1673, %v1674
    %v1676 = vrot.slane %v1675, 2
    %v1677 = vadd.f32 %v1675, %v1676
    %v1678 = vrot.slane %v1677, 1
    %v1679 = vadd.f32 %v1677, %v1678
    %v1680 = vadd.f32 %v1660, %v1664
    %v1681 = vrot.slane %v1680, 4
    %v1682 = vadd.f32 %v1680, %v1681
    %v1683 = vrot.slane %v1682, 2
    %v1684 = vadd.f32 %v1682, %v1683
    %v1685 = vrot.slane %v1684, 1
    %v1686 = vadd.f32 %v1684, %v1685
    %v1687 = vadd.f32 %v1661, %v1665
    %v1688 = vrot.slane %v1687, 4
    %v1689 = vadd.f32 %v1687, %v1688
    %v1690 = vrot.slane %v1689, 2
    %v1691 = vadd.f32 %v1689, %v1690
    %v1692 = vrot.slane %v1691, 1
    %v1693 = vadd.f32 %v1691, %v1692
    %v1694 = vmul.f32 %v1672, %v1645
    %v1695 = vmul.f32 %v1679, %v1645
    %v1696 = vmul.f32 %v1686, %v1645
    %v1697 = vmul.f32 %v1693, %v1645
    %v1698 = vadd.f32 %v1694, 1e-05
    %v1699 = vadd.f32 %v1695, 1e-05
    %v1700 = vadd.f32 %v1696, 1e-05
    %v1701 = vadd.f32 %v1697, 1e-05
    %v1702 = vrsqrt.pop %v1698
    %v1703 = vrsqrt.pop %v1699
    %v1704 = vrsqrt.pop %v1700
    %v1705 = vrsqrt.pop %v1701
    %v1710 = vcombine.low %v1702, %v1703
    %v1711 = vcombine.low %v1704, %v1705
    %v1713 = vunpack.c.l.s4 1966171168
    %v1714 = vunpack.c.0.s8 %v1713
    %v1715 = vlaneseq
    %v1716 = vshrl.u32 %v1715, 7
    %v1717 = vsub.s32 %v1714, %v1716
    %v1718 = vrot.slane %v1710, %v1717
    %v1720 = vunpack.c.l.s4 1966171168
    %v1721 = vunpack.c.0.s8 %v1720
    %v1722 = vlaneseq
    %v1723 = vshrl.u32 %v1722, 7
    %v1724 = vsub.s32 %v1721, %v1723
    %v1725 = vrot.slane %v1711, %v1724
    %v1726 = vcombine.low %v1718, %v1725
    %v1728 = vunpack.c.l.s4 1966171168
    %v1729 = vunpack.c.0.s8 %v1728
    %v1730 = vlaneseq
    %v1731 = vshrl.u32 %v1730, 7
    %v1732 = vsub.s32 %v1729, %v1731
    %v1733 = vrot.slane %v1726, %v1732
    %v1735 = vmul.f32 %v1615, %v1733
    %v1737 = vlaneseq
    %v1738 = vshrl.u32 %v1737, 7
    %v1739 = vsub.s32 0, %v1738
    %v1740 = vrot.slane %v1735, %v1739
    %v1741 = vlaneseq
    %v1742 = vshrl.u32 %v1741, 7
    %v1743 = vsub.s32 1, %v1742
    %v1744 = vrot.slane %v1735, %v1743
    %v1745 = vlaneseq
    %v1746 = vshrl.u32 %v1745, 7
    %v1747 = vsub.s32 2, %v1746
    %v1748 = vrot.slane %v1735, %v1747
    %v1749 = vlaneseq
    %v1750 = vshrl.u32 %v1749, 7
    %v1751 = vsub.s32 3, %v1750
    %v1752 = vrot.slane %v1735, %v1751
    %v1757 = vmul.f32 %v1646, %v1740
    %v1758 = vmul.f32 %v1647, %v1744
    %v1759 = vmul.f32 %v1648, %v1748
    %v1760 = vmul.f32 %v1649, %v1752
    %v1765 = vcombine.low %v1757, %v1758
    %v1766 = vcombine.low %v1759, %v1760
    %v1768 = vunpack.c.l.s4 1966171168
    %v1769 = vunpack.c.0.s8 %v1768
    %v1770 = vlaneseq
    %v1771 = vshrl.u32 %v1770, 7
    %v1772 = vsub.s32 %v1769, %v1771
    %v1773 = vrot.slane %v1765, %v1772
    %v1775 = vunpack.c.l.s4 1966171168
    %v1776 = vunpack.c.0.s8 %v1775
    %v1777 = vlaneseq
    %v1778 = vshrl.u32 %v1777, 7
    %v1779 = vsub.s32 %v1776, %v1778
    %v1780 = vrot.slane %v1766, %v1779
    %v1781 = vcombine.low %v1773, %v1780
    %v1783 = vunpack.c.l.s4 1966171168
    %v1784 = vunpack.c.0.s8 %v1783
    %v1785 = vlaneseq
    %v1786 = vshrl.u32 %v1785, 7
    %v1787 = vsub.s32 %v1784, %v1786
    %v1788 = vrot.slane %v1781, %v1787
    %v1790 = vsub.f32 %v1616, %v1788
    %v1791 = vmul.f32 %v1435, %v1740
    %v1792 = vmul.f32 %v1437, %v1744
    %v1793 = vmul.f32 %v1607, %v1748
    %v1794 = vmul.f32 %v1609, %v1752
    %v1795 = vmul.f32 %v1439, %v1740
    %v1796 = vmul.f32 %v1441, %v1744
    %v1797 = vmul.f32 %v1611, %v1748
    %v1798 = vmul.f32 %v1613, %v1752
    %v1800 = vlaneseq
    %v1801 = vshrl.u32 %v1800, 7
    %v1802 = vsub.s32 0, %v1801
    %v1803 = vrot.slane %v1790, %v1802
    %v1804 = vlaneseq
    %v1805 = vshrl.u32 %v1804, 7
    %v1806 = vsub.s32 1, %v1805
    %v1807 = vrot.slane %v1790, %v1806
    %v1808 = vlaneseq
    %v1809 = vshrl.u32 %v1808, 7
    %v1810 = vsub.s32 2, %v1809
    %v1811 = vrot.slane %v1790, %v1810
    %v1812 = vlaneseq
    %v1813 = vshrl.u32 %v1812, 7
    %v1814 = vsub.s32 3, %v1813
    %v1815 = vrot.slane %v1790, %v1814
    %v1820 = vadd.f32 %v1791, %v1803
    %v1821 = vadd.f32 %v1792, %v1807
    %v1822 = vadd.f32 %v1793, %v1811
    %v1823 = vadd.f32 %v1794, %v1815
    %v1824 = vadd.f32 %v1795, %v1803
    %v1825 = vadd.f32 %v1796, %v1807
    %v1826 = vadd.f32 %v1797, %v1811
    %v1827 = vadd.f32 %v1798, %v1815
    %v1828 = vmax.f32 %v1820, 0.0
    %v1829 = vmax.f32 %v1821, 0.0
    %v1830 = vmax.f32 %v1822, 0.0
    %v1831 = vmax.f32 %v1823, 0.0
    %v1832 = vmax.f32 %v1824, 0.0
    %v1833 = vmax.f32 %v1825, 0.0
    %v1834 = vmax.f32 %v1826, 0.0
    %v1835 = vmax.f32 %v1827, 0.0
    %v1836 = vpack.c.bf16 %v1832, %v1828
    %v1837 = vpack.c.bf16 %v1833, %v1829
    %v1838 = vpack.c.bf16 %v1834, %v1830
    %v1839 = vpack.c.bf16 %v1835, %v1831
    %v1840 = vld [vmem:[%s4] sm:$0xff]
    %v1841 = vld [vmem:[%s4 + $0x8] sm:$0xff]
    %v1842 = vld [vmem:[%s4 + $0x10] sm:$0xff]
    %v1843 = vld [vmem:[%s4 + $0x18] sm:$0xff]
    %v1844 = vld [vmem:[%s4 + $0x20] sm:$0xff]
    %v1845 = vld [vmem:[%s4 + $0x28] sm:$0xff]
    %v1846 = vld [vmem:[%s4 + $0x30] sm:$0xff]
    %v1847 = vld [vmem:[%s4 + $0x38] sm:$0xff]
    %v1848 = vld [vmem:[%s4 + $0x40] sm:$0xff]
    %v1849 = vld [vmem:[%s4 + $0x48] sm:$0xff]
    %v1850 = vld [vmem:[%s4 + $0x50] sm:$0xff]
    %v1851 = vld [vmem:[%s4 + $0x58] sm:$0xff]
    %v1852 = vld [vmem:[%s4 + $0x60] sm:$0xff]
    %v1853 = vld [vmem:[%s4 + $0x68] sm:$0xff]
    %v1854 = vld [vmem:[%s4 + $0x70] sm:$0xff]
    %v1855 = vld [vmem:[%s4 + $0x78] sm:$0xff]
    %v1856 = vld [vmem:[%s4 + $0x80] sm:$0xff]
    %v1857 = vld [vmem:[%s4 + $0x88] sm:$0xff]
    %v1858 = vld [vmem:[%s4 + $0x90] sm:$0xff]
    %v1859 = vld [vmem:[%s4 + $0x98] sm:$0xff]
    %v1860 = vld [vmem:[%s4 + $0xa0] sm:$0xff]
    %v1861 = vld [vmem:[%s4 + $0xa8] sm:$0xff]
    %v1862 = vld [vmem:[%s4 + $0xb0] sm:$0xff]
    %v1863 = vld [vmem:[%s4 + $0xb8] sm:$0xff]
    %v1864 = vld [vmem:[%s4 + $0xc0] sm:$0xff]
    %v1865 = vld [vmem:[%s4 + $0xc8] sm:$0xff]
    %v1866 = vld [vmem:[%s4 + $0xd0] sm:$0xff]
    %v1867 = vld [vmem:[%s4 + $0xd8] sm:$0xff]
    %v1868 = vld [vmem:[%s4 + $0xe0] sm:$0xff]
    %v1869 = vld [vmem:[%s4 + $0xe8] sm:$0xff]
    %v1870 = vld [vmem:[%s4 + $0xf0] sm:$0xff]
    %v1871 = vld [vmem:[%s4 + $0xf8] sm:$0xff]
    %v1872 = vld [vmem:[%s4 + $0x100] sm:$0xff]
    %v1873 = vld [vmem:[%s4 + $0x108] sm:$0xff]
    %v1874 = vld [vmem:[%s4 + $0x110] sm:$0xff]
    %v1875 = vld [vmem:[%s4 + $0x118] sm:$0xff]
    %v1876 = vld [vmem:[%s4 + $0x120] sm:$0xff]
    %v1877 = vld [vmem:[%s4 + $0x128] sm:$0xff]
    %v1878 = vld [vmem:[%s4 + $0x130] sm:$0xff]
    %v1879 = vld [vmem:[%s4 + $0x138] sm:$0xff]
    %v1880 = vld [vmem:[%s4 + $0x140] sm:$0xff]
    %v1881 = vld [vmem:[%s4 + $0x148] sm:$0xff]
    %v1882 = vld [vmem:[%s4 + $0x150] sm:$0xff]
    %v1883 = vld [vmem:[%s4 + $0x158] sm:$0xff]
    %v1884 = vld [vmem:[%s4 + $0x160] sm:$0xff]
    %v1885 = vld [vmem:[%s4 + $0x168] sm:$0xff]
    %v1886 = vld [vmem:[%s4 + $0x170] sm:$0xff]
    %v1887 = vld [vmem:[%s4 + $0x178] sm:$0xff]
    %v1888 = vld [vmem:[%s4 + $0x180] sm:$0xff]
    %v1889 = vld [vmem:[%s4 + $0x188] sm:$0xff]
    %v1890 = vld [vmem:[%s4 + $0x190] sm:$0xff]
    %v1891 = vld [vmem:[%s4 + $0x198] sm:$0xff]
    %v1892 = vld [vmem:[%s4 + $0x1a0] sm:$0xff]
    %v1893 = vld [vmem:[%s4 + $0x1a8] sm:$0xff]
    %v1894 = vld [vmem:[%s4 + $0x1b0] sm:$0xff]
    %v1895 = vld [vmem:[%s4 + $0x1b8] sm:$0xff]
    %v1896 = vld [vmem:[%s4 + $0x1c0] sm:$0xff]
    %v1897 = vld [vmem:[%s4 + $0x1c8] sm:$0xff]
    %v1898 = vld [vmem:[%s4 + $0x1d0] sm:$0xff]
    %v1899 = vld [vmem:[%s4 + $0x1d8] sm:$0xff]
    %v1900 = vld [vmem:[%s4 + $0x1e0] sm:$0xff]
    %v1901 = vld [vmem:[%s4 + $0x1e8] sm:$0xff]
    %v1902 = vld [vmem:[%s4 + $0x1f0] sm:$0xff]
    %v1903 = vld [vmem:[%s4 + $0x1f8] sm:$0xff]
    %v1968 = vunpack.c.l.b16 %v1840
    %v1969 = vunpack.c.h.b16 %v1840
    %v1970 = vunpack.c.l.b16 %v1841
    %v1971 = vunpack.c.h.b16 %v1841
    %v1972 = vunpack.c.l.b16 %v1842
    %v1973 = vunpack.c.h.b16 %v1842
    %v1974 = vunpack.c.l.b16 %v1843
    %v1975 = vunpack.c.h.b16 %v1843
    %v1976 = vunpack.c.l.b16 %v1844
    %v1977 = vunpack.c.h.b16 %v1844
    %v1978 = vunpack.c.l.b16 %v1845
    %v1979 = vunpack.c.h.b16 %v1845
    %v1980 = vunpack.c.l.b16 %v1846
    %v1981 = vunpack.c.h.b16 %v1846
    %v1982 = vunpack.c.l.b16 %v1847
    %v1983 = vunpack.c.h.b16 %v1847
    %v1984 = vunpack.c.l.b16 %v1848
    %v1985 = vunpack.c.h.b16 %v1848
    %v1986 = vunpack.c.l.b16 %v1849
    %v1987 = vunpack.c.h.b16 %v1849
    %v1988 = vunpack.c.l.b16 %v1850
    %v1989 = vunpack.c.h.b16 %v1850
    %v1990 = vunpack.c.l.b16 %v1851
    %v1991 = vunpack.c.h.b16 %v1851
    %v1992 = vunpack.c.l.b16 %v1852
    %v1993 = vunpack.c.h.b16 %v1852
    %v1994 = vunpack.c.l.b16 %v1853
    %v1995 = vunpack.c.h.b16 %v1853
    %v1996 = vunpack.c.l.b16 %v1854
    %v1997 = vunpack.c.h.b16 %v1854
    %v1998 = vunpack.c.l.b16 %v1855
    %v1999 = vunpack.c.h.b16 %v1855
    %v2000 = vunpack.c.l.b16 %v1856
    %v2001 = vunpack.c.h.b16 %v1856
    %v2002 = vunpack.c.l.b16 %v1857
    %v2003 = vunpack.c.h.b16 %v1857
    %v2004 = vunpack.c.l.b16 %v1858
    %v2005 = vunpack.c.h.b16 %v1858
    %v2006 = vunpack.c.l.b16 %v1859
    %v2007 = vunpack.c.h.b16 %v1859
    %v2008 = vunpack.c.l.b16 %v1860
    %v2009 = vunpack.c.h.b16 %v1860
    %v2010 = vunpack.c.l.b16 %v1861
    %v2011 = vunpack.c.h.b16 %v1861
    %v2012 = vunpack.c.l.b16 %v1862
    %v2013 = vunpack.c.h.b16 %v1862
    %v2014 = vunpack.c.l.b16 %v1863
    %v2015 = vunpack.c.h.b16 %v1863
    %v2016 = vunpack.c.l.b16 %v1864
    %v2017 = vunpack.c.h.b16 %v1864
    %v2018 = vunpack.c.l.b16 %v1865
    %v2019 = vunpack.c.h.b16 %v1865
    %v2020 = vunpack.c.l.b16 %v1866
    %v2021 = vunpack.c.h.b16 %v1866
    %v2022 = vunpack.c.l.b16 %v1867
    %v2023 = vunpack.c.h.b16 %v1867
    %v2024 = vunpack.c.l.b16 %v1868
    %v2025 = vunpack.c.h.b16 %v1868
    %v2026 = vunpack.c.l.b16 %v1869
    %v2027 = vunpack.c.h.b16 %v1869
    %v2028 = vunpack.c.l.b16 %v1870
    %v2029 = vunpack.c.h.b16 %v1870
    %v2030 = vunpack.c.l.b16 %v1871
    %v2031 = vunpack.c.h.b16 %v1871
    %v2032 = vunpack.c.l.b16 %v1872
    %v2033 = vunpack.c.h.b16 %v1872
    %v2034 = vunpack.c.l.b16 %v1873
    %v2035 = vunpack.c.h.b16 %v1873
    %v2036 = vunpack.c.l.b16 %v1874
    %v2037 = vunpack.c.h.b16 %v1874
    %v2038 = vunpack.c.l.b16 %v1875
    %v2039 = vunpack.c.h.b16 %v1875
    %v2040 = vunpack.c.l.b16 %v1876
    %v2041 = vunpack.c.h.b16 %v1876
    %v2042 = vunpack.c.l.b16 %v1877
    %v2043 = vunpack.c.h.b16 %v1877
    %v2044 = vunpack.c.l.b16 %v1878
    %v2045 = vunpack.c.h.b16 %v1878
    %v2046 = vunpack.c.l.b16 %v1879
    %v2047 = vunpack.c.h.b16 %v1879
    %v2048 = vunpack.c.l.b16 %v1880
    %v2049 = vunpack.c.h.b16 %v1880
    %v2050 = vunpack.c.l.b16 %v1881
    %v2051 = vunpack.c.h.b16 %v1881
    %v2052 = vunpack.c.l.b16 %v1882
    %v2053 = vunpack.c.h.b16 %v1882
    %v2054 = vunpack.c.l.b16 %v1883
    %v2055 = vunpack.c.h.b16 %v1883
    %v2056 = vunpack.c.l.b16 %v1884
    %v2057 = vunpack.c.h.b16 %v1884
    %v2058 = vunpack.c.l.b16 %v1885
    %v2059 = vunpack.c.h.b16 %v1885
    %v2060 = vunpack.c.l.b16 %v1886
    %v2061 = vunpack.c.h.b16 %v1886
    %v2062 = vunpack.c.l.b16 %v1887
    %v2063 = vunpack.c.h.b16 %v1887
    %v2064 = vunpack.c.l.b16 %v1888
    %v2065 = vunpack.c.h.b16 %v1888
    %v2066 = vunpack.c.l.b16 %v1889
    %v2067 = vunpack.c.h.b16 %v1889
    %v2068 = vunpack.c.l.b16 %v1890
    %v2069 = vunpack.c.h.b16 %v1890
    %v2070 = vunpack.c.l.b16 %v1891
    %v2071 = vunpack.c.h.b16 %v1891
    %v2072 = vunpack.c.l.b16 %v1892
    %v2073 = vunpack.c.h.b16 %v1892
    %v2074 = vunpack.c.l.b16 %v1893
    %v2075 = vunpack.c.h.b16 %v1893
    %v2076 = vunpack.c.l.b16 %v1894
    %v2077 = vunpack.c.h.b16 %v1894
    %v2078 = vunpack.c.l.b16 %v1895
    %v2079 = vunpack.c.h.b16 %v1895
    %v2080 = vunpack.c.l.b16 %v1896
    %v2081 = vunpack.c.h.b16 %v1896
    %v2082 = vunpack.c.l.b16 %v1897
    %v2083 = vunpack.c.h.b16 %v1897
    %v2084 = vunpack.c.l.b16 %v1898
    %v2085 = vunpack.c.h.b16 %v1898
    %v2086 = vunpack.c.l.b16 %v1899
    %v2087 = vunpack.c.h.b16 %v1899
    %v2088 = vunpack.c.l.b16 %v1900
    %v2089 = vunpack.c.h.b16 %v1900
    %v2090 = vunpack.c.l.b16 %v1901
    %v2091 = vunpack.c.h.b16 %v1901
    %v2092 = vunpack.c.l.b16 %v1902
    %v2093 = vunpack.c.h.b16 %v1902
    %v2094 = vunpack.c.l.b16 %v1903
    %v2095 = vunpack.c.h.b16 %v1903
    %v2096 = vpack.c.b16 %v1970, %v1968
    %v2097 = vpack.c.b16 %v1971, %v1969
    %v2098 = vpack.c.b16 %v1974, %v1972
    %v2099 = vpack.c.b16 %v1975, %v1973
    %v2100 = vpack.c.b16 %v1978, %v1976
    %v2101 = vpack.c.b16 %v1979, %v1977
    %v2102 = vpack.c.b16 %v1982, %v1980
    %v2103 = vpack.c.b16 %v1983, %v1981
    %v2104 = vpack.c.b16 %v1986, %v1984
    %v2105 = vpack.c.b16 %v1987, %v1985
    %v2106 = vpack.c.b16 %v1990, %v1988
    %v2107 = vpack.c.b16 %v1991, %v1989
    %v2108 = vpack.c.b16 %v1994, %v1992
    %v2109 = vpack.c.b16 %v1995, %v1993
    %v2110 = vpack.c.b16 %v1998, %v1996
    %v2111 = vpack.c.b16 %v1999, %v1997
    %v2112 = vpack.c.b16 %v2002, %v2000
    %v2113 = vpack.c.b16 %v2003, %v2001
    %v2114 = vpack.c.b16 %v2006, %v2004
    %v2115 = vpack.c.b16 %v2007, %v2005
    %v2116 = vpack.c.b16 %v2010, %v2008
    %v2117 = vpack.c.b16 %v2011, %v2009
    %v2118 = vpack.c.b16 %v2014, %v2012
    %v2119 = vpack.c.b16 %v2015, %v2013
    %v2120 = vpack.c.b16 %v2018, %v2016
    %v2121 = vpack.c.b16 %v2019, %v2017
    %v2122 = vpack.c.b16 %v2022, %v2020
    %v2123 = vpack.c.b16 %v2023, %v2021
    %v2124 = vpack.c.b16 %v2026, %v2024
    %v2125 = vpack.c.b16 %v2027, %v2025
    %v2126 = vpack.c.b16 %v2030, %v2028
    %v2127 = vpack.c.b16 %v2031, %v2029
    %v2128 = vpack.c.b16 %v2034, %v2032
    %v2129 = vpack.c.b16 %v2035, %v2033
    %v2130 = vpack.c.b16 %v2038, %v2036
    %v2131 = vpack.c.b16 %v2039, %v2037
    %v2132 = vpack.c.b16 %v2042, %v2040
    %v2133 = vpack.c.b16 %v2043, %v2041
    %v2134 = vpack.c.b16 %v2046, %v2044
    %v2135 = vpack.c.b16 %v2047, %v2045
    %v2136 = vpack.c.b16 %v2050, %v2048
    %v2137 = vpack.c.b16 %v2051, %v2049
    %v2138 = vpack.c.b16 %v2054, %v2052
    %v2139 = vpack.c.b16 %v2055, %v2053
    %v2140 = vpack.c.b16 %v2058, %v2056
    %v2141 = vpack.c.b16 %v2059, %v2057
    %v2142 = vpack.c.b16 %v2062, %v2060
    %v2143 = vpack.c.b16 %v2063, %v2061
    %v2144 = vpack.c.b16 %v2066, %v2064
    %v2145 = vpack.c.b16 %v2067, %v2065
    %v2146 = vpack.c.b16 %v2070, %v2068
    %v2147 = vpack.c.b16 %v2071, %v2069
    %v2148 = vpack.c.b16 %v2074, %v2072
    %v2149 = vpack.c.b16 %v2075, %v2073
    %v2150 = vpack.c.b16 %v2078, %v2076
    %v2151 = vpack.c.b16 %v2079, %v2077
    %v2152 = vpack.c.b16 %v2082, %v2080
    %v2153 = vpack.c.b16 %v2083, %v2081
    %v2154 = vpack.c.b16 %v2086, %v2084
    %v2155 = vpack.c.b16 %v2087, %v2085
    %v2156 = vpack.c.b16 %v2090, %v2088
    %v2157 = vpack.c.b16 %v2091, %v2089
    %v2158 = vpack.c.b16 %v2094, %v2092
    %v2159 = vpack.c.b16 %v2095, %v2093
    %2224 = vmatprep.subr.bf16.mxu0 %v2111
    %2225 = vmatpush1.bf16.msra.mxu0 %v2110
    %2226 = vmatprep.subr.bf16.mxu0 %v2109
    %2227 = vmatpush1.bf16.msra.mxu0 %v2108
    %2228 = vmatprep.subr.bf16.mxu0 %v2107
    %2229 = vmatpush1.bf16.msra.mxu0 %v2106
    %2230 = vmatprep.subr.bf16.mxu0 %v2105
    %2231 = vmatpush1.bf16.msra.mxu0 %v2104
    %2232 = vmatprep.subr.bf16.mxu0 %v2103
    %2233 = vmatpush1.bf16.msra.mxu0 %v2102
    %2234 = vmatprep.subr.bf16.mxu0 %v2101
    %2235 = vmatpush1.bf16.msra.mxu0 %v2100
    %2236 = vmatprep.subr.bf16.mxu0 %v2099
    %2237 = vmatpush1.bf16.msra.mxu0 %v2098
    %2238 = vmatprep.subr.bf16.mxu0 %v2097
    %2239 = vmatpush1.bf16.msra.mxu0 %v2096
    %2240 = vmatprep.subr.bf16.mxu0 %v2127
    %2241 = vmatpush2.bf16.msra.mxu0 %v2126
    %2242 = vmatprep.subr.bf16.mxu0 %v2125
    %2243 = vmatpush2.bf16.msra.mxu0 %v2124
    %2244 = vmatprep.subr.bf16.mxu0 %v2123
    %2245 = vmatpush2.bf16.msra.mxu0 %v2122
    %2246 = vmatprep.subr.bf16.mxu0 %v2121
    %2247 = vmatpush2.bf16.msra.mxu0 %v2120
    %2248 = vmatprep.subr.bf16.mxu0 %v2119
    %2249 = vmatpush2.bf16.msra.mxu0 %v2118
    %2250 = vmatprep.subr.bf16.mxu0 %v2117
    %2251 = vmatpush2.bf16.msra.mxu0 %v2116
    %2252 = vmatprep.subr.bf16.mxu0 %v2115
    %2253 = vmatpush2.bf16.msra.mxu0 %v2114
    %2254 = vmatprep.subr.bf16.mxu0 %v2113
    %2255 = vmatpush2.bf16.msra.mxu0 %v2112
    %2256 = vmatprep.mubr.bf16.mxu0 %v1837
    %2257 = vmatmul.mubr.bf16.gmra.mxu0 %v1836
    %v2258 = vpop.f32.mrf.mxu0
    %v2259 = vadd.f32 0.0, %v2258
    %v2260 = vpop.f32.mrf.mxu0
    %v2261 = vadd.f32 0.0, %v2260
    %v2262 = vpop.f32.mrf.mxu0
    %v2263 = vadd.f32 0.0, %v2262
    %v2264 = vpop.f32.mrf.mxu0
    %v2265 = vadd.f32 0.0, %v2264
    %2266 = vdwg.mxu0
    %2267 = vmatprep.subr.bf16.mxu0 %v2143
    %2268 = vmatpush1.bf16.msra.mxu0 %v2142
    %2269 = vmatprep.subr.bf16.mxu0 %v2141
    %2270 = vmatpush1.bf16.msra.mxu0 %v2140
    %2271 = vmatprep.subr.bf16.mxu0 %v2139
    %2272 = vmatpush1.bf16.msra.mxu0 %v2138
    %2273 = vmatprep.subr.bf16.mxu0 %v2137
    %2274 = vmatpush1.bf16.msra.mxu0 %v2136
    %2275 = vmatprep.subr.bf16.mxu0 %v2135
    %2276 = vmatpush1.bf16.msra.mxu0 %v2134
    %2277 = vmatprep.subr.bf16.mxu0 %v2133
    %2278 = vmatpush1.bf16.msra.mxu0 %v2132
    %2279 = vmatprep.subr.bf16.mxu0 %v2131
    %2280 = vmatpush1.bf16.msra.mxu0 %v2130
    %2281 = vmatprep.subr.bf16.mxu0 %v2129
    %2282 = vmatpush1.bf16.msra.mxu0 %v2128
    %2283 = vmatprep.subr.bf16.mxu0 %v2159
    %2284 = vmatpush2.bf16.msra.mxu0 %v2158
    %2285 = vmatprep.subr.bf16.mxu0 %v2157
    %2286 = vmatpush2.bf16.msra.mxu0 %v2156
    %2287 = vmatprep.subr.bf16.mxu0 %v2155
    %2288 = vmatpush2.bf16.msra.mxu0 %v2154
    %2289 = vmatprep.subr.bf16.mxu0 %v2153
    %2290 = vmatpush2.bf16.msra.mxu0 %v2152
    %2291 = vmatprep.subr.bf16.mxu0 %v2151
    %2292 = vmatpush2.bf16.msra.mxu0 %v2150
    %2293 = vmatprep.subr.bf16.mxu0 %v2149
    %2294 = vmatpush2.bf16.msra.mxu0 %v2148
    %2295 = vmatprep.subr.bf16.mxu0 %v2147
    %2296 = vmatpush2.bf16.msra.mxu0 %v2146
    %2297 = vmatprep.subr.bf16.mxu0 %v2145
    %2298 = vmatpush2.bf16.msra.mxu0 %v2144
    %2299 = vmatprep.mubr.bf16.mxu0 %v1839
    %2300 = vmatmul.mubr.bf16.gmra.mxu0 %v1838
    %v2301 = vpop.f32.mrf.mxu0
    %v2302 = vadd.f32 %v2259, %v2301
    %v2303 = vpop.f32.mrf.mxu0
    %v2304 = vadd.f32 %v2261, %v2303
    %v2305 = vpop.f32.mrf.mxu0
    %v2306 = vadd.f32 %v2263, %v2305
    %v2307 = vpop.f32.mrf.mxu0
    %v2308 = vadd.f32 %v2265, %v2307
    %2309 = vdwg.mxu0
    %v2310 = vld [vmem:[%s5] sm:$0x3]
    %v2311 = vld [vmem:[%s6] sm:$0x3]
    %v2312 = vadd.f32 %v2302, %v2306
    %v2313 = vrot.slane %v2312, 4
    %v2314 = vadd.f32 %v2312, %v2313
    %v2315 = vrot.slane %v2314, 2
    %v2316 = vadd.f32 %v2314, %v2315
    %v2317 = vrot.slane %v2316, 1
    %v2318 = vadd.f32 %v2316, %v2317
    %v2319 = vadd.f32 %v2304, %v2308
    %v2320 = vrot.slane %v2319, 4
    %v2321 = vadd.f32 %v2319, %v2320
    %v2322 = vrot.slane %v2321, 2
    %v2323 = vadd.f32 %v2321, %v2322
    %v2324 = vrot.slane %v2323, 1
    %v2325 = vadd.f32 %v2323, %v2324
    %v2326 = vmul.f32 %v2318, %v1645
    %v2327 = vmul.f32 %v2325, %v1645
    %v2328 = vsub.f32 %v2302, %v2326
    %v2329 = vsub.f32 %v2304, %v2327
    %v2330 = vsub.f32 %v2306, %v2326
    %v2331 = vsub.f32 %v2308, %v2327
    %v2332 = vmul.f32 %v2328, %v2328
    %v2333 = vmul.f32 %v2329, %v2329
    %v2334 = vmul.f32 %v2330, %v2330
    %v2335 = vmul.f32 %v2331, %v2331
    %v2336 = vadd.f32 %v2332, %v2334
    %v2337 = vrot.slane %v2336, 4
    %v2338 = vadd.f32 %v2336, %v2337
    %v2339 = vrot.slane %v2338, 2
    %v2340 = vadd.f32 %v2338, %v2339
    %v2341 = vrot.slane %v2340, 1
    %v2342 = vadd.f32 %v2340, %v2341
    %v2343 = vadd.f32 %v2333, %v2335
    %v2344 = vrot.slane %v2343, 4
    %v2345 = vadd.f32 %v2343, %v2344
    %v2346 = vrot.slane %v2345, 2
    %v2347 = vadd.f32 %v2345, %v2346
    %v2348 = vrot.slane %v2347, 1
    %v2349 = vadd.f32 %v2347, %v2348
    %v2350 = vmul.f32 %v2342, %v1645
    %v2351 = vmul.f32 %v2349, %v1645
    %v2352 = vadd.f32 %v2350, 1e-05
    %v2353 = vadd.f32 %v2351, 1e-05
    %v2354 = vrsqrt.pop %v2352
    %v2355 = vrsqrt.pop %v2353
    %v2358 = vcombine.low %v2354, %v2355
    %v2360 = vunpack.c.l.s4 1966171168
    %v2361 = vunpack.c.0.s8 %v2360
    %v2362 = vlaneseq
    %v2363 = vshrl.u32 %v2362, 7
    %v2364 = vsub.s32 %v2361, %v2363
    %v2365 = vrot.slane %v2358, %v2364
    %v2367 = vunpack.c.l.s4 1966171168
    %v2368 = vunpack.c.0.s8 %v2367
    %v2369 = vlaneseq
    %v2370 = vshrl.u32 %v2369, 7
    %v2371 = vsub.s32 %v2368, %v2370
    %v2372 = vrot.slane %v2365, %v2371
    %v2374 = vmul.f32 %v2310, %v2372
    %v2376 = vlaneseq
    %v2377 = vshrl.u32 %v2376, 7
    %v2378 = vsub.s32 0, %v2377
    %v2379 = vrot.slane %v2374, %v2378
    %v2380 = vlaneseq
    %v2381 = vshrl.u32 %v2380, 7
    %v2382 = vsub.s32 1, %v2381
    %v2383 = vrot.slane %v2374, %v2382
    %v2386 = vmul.f32 %v2326, %v2379
    %v2387 = vmul.f32 %v2327, %v2383
    %v2390 = vcombine.low %v2386, %v2387
    %v2392 = vunpack.c.l.s4 1966171168
    %v2393 = vunpack.c.0.s8 %v2392
    %v2394 = vlaneseq
    %v2395 = vshrl.u32 %v2394, 7
    %v2396 = vsub.s32 %v2393, %v2395
    %v2397 = vrot.slane %v2390, %v2396
    %v2399 = vunpack.c.l.s4 1966171168
    %v2400 = vunpack.c.0.s8 %v2399
    %v2401 = vlaneseq
    %v2402 = vshrl.u32 %v2401, 7
    %v2403 = vsub.s32 %v2400, %v2402
    %v2404 = vrot.slane %v2397, %v2403
    %v2406 = vsub.f32 %v2311, %v2404
    %v2407 = vmul.f32 %v2302, %v2379
    %v2408 = vmul.f32 %v2304, %v2383
    %v2409 = vmul.f32 %v2306, %v2379
    %v2410 = vmul.f32 %v2308, %v2383
    %v2412 = vlaneseq
    %v2413 = vshrl.u32 %v2412, 7
    %v2414 = vsub.s32 0, %v2413
    %v2415 = vrot.slane %v2406, %v2414
    %v2416 = vlaneseq
    %v2417 = vshrl.u32 %v2416, 7
    %v2418 = vsub.s32 1, %v2417
    %v2419 = vrot.slane %v2406, %v2418
    %v2422 = vadd.f32 %v2407, %v2415
    %v2423 = vadd.f32 %v2408, %v2419
    %v2424 = vadd.f32 %v2409, %v2415
    %v2425 = vadd.f32 %v2410, %v2419
    %v2426 = vmax.f32 %v2422, 0.0
    %v2427 = vmax.f32 %v2423, 0.0
    %v2428 = vmax.f32 %v2424, 0.0
    %v2429 = vmax.f32 %v2425, 0.0
    %v2430 = vpack.c.bf16 %v2428, %v2426
    %v2431 = vpack.c.bf16 %v2429, %v2427
    %v2432 = vld [vmem:[%s7] sm:$0xf]
    %v2433 = vld [vmem:[%s7 + $0x4] sm:$0xf]
    %v2434 = vld [vmem:[%s7 + $0x8] sm:$0xf]
    %v2435 = vld [vmem:[%s7 + $0xc] sm:$0xf]
    %v2436 = vld [vmem:[%s7 + $0x10] sm:$0xf]
    %v2437 = vld [vmem:[%s7 + $0x14] sm:$0xf]
    %v2438 = vld [vmem:[%s7 + $0x18] sm:$0xf]
    %v2439 = vld [vmem:[%s7 + $0x1c] sm:$0xf]
    %v2440 = vld [vmem:[%s7 + $0x20] sm:$0xf]
    %v2441 = vld [vmem:[%s7 + $0x24] sm:$0xf]
    %v2442 = vld [vmem:[%s7 + $0x28] sm:$0xf]
    %v2443 = vld [vmem:[%s7 + $0x2c] sm:$0xf]
    %v2444 = vld [vmem:[%s7 + $0x30] sm:$0xf]
    %v2445 = vld [vmem:[%s7 + $0x34] sm:$0xf]
    %v2446 = vld [vmem:[%s7 + $0x38] sm:$0xf]
    %v2447 = vld [vmem:[%s7 + $0x3c] sm:$0xf]
    %v2448 = vld [vmem:[%s7 + $0x40] sm:$0xf]
    %v2449 = vld [vmem:[%s7 + $0x44] sm:$0xf]
    %v2450 = vld [vmem:[%s7 + $0x48] sm:$0xf]
    %v2451 = vld [vmem:[%s7 + $0x4c] sm:$0xf]
    %v2452 = vld [vmem:[%s7 + $0x50] sm:$0xf]
    %v2453 = vld [vmem:[%s7 + $0x54] sm:$0xf]
    %v2454 = vld [vmem:[%s7 + $0x58] sm:$0xf]
    %v2455 = vld [vmem:[%s7 + $0x5c] sm:$0xf]
    %v2456 = vld [vmem:[%s7 + $0x60] sm:$0xf]
    %v2457 = vld [vmem:[%s7 + $0x64] sm:$0xf]
    %v2458 = vld [vmem:[%s7 + $0x68] sm:$0xf]
    %v2459 = vld [vmem:[%s7 + $0x6c] sm:$0xf]
    %v2460 = vld [vmem:[%s7 + $0x70] sm:$0xf]
    %v2461 = vld [vmem:[%s7 + $0x74] sm:$0xf]
    %v2462 = vld [vmem:[%s7 + $0x78] sm:$0xf]
    %v2463 = vld [vmem:[%s7 + $0x7c] sm:$0xf]
    %v2464 = vld [vmem:[%s8] sm:$0x1]
    %v2466 = vlaneseq
    %v2467 = vshrl.u32 %v2466, 7
    %v2468 = vsub.s32 0, %v2467
    %v2469 = vrot.slane %v2464, %v2468
    %v2503 = vunpack.c.l.b16 %v2432
    %v2504 = vunpack.c.l.b16 %v2433
    %v2505 = vunpack.c.l.b16 %v2434
    %v2506 = vunpack.c.l.b16 %v2435
    %v2507 = vunpack.c.l.b16 %v2436
    %v2508 = vunpack.c.l.b16 %v2437
    %v2509 = vunpack.c.l.b16 %v2438
    %v2510 = vunpack.c.l.b16 %v2439
    %v2511 = vunpack.c.l.b16 %v2440
    %v2512 = vunpack.c.l.b16 %v2441
    %v2513 = vunpack.c.l.b16 %v2442
    %v2514 = vunpack.c.l.b16 %v2443
    %v2515 = vunpack.c.l.b16 %v2444
    %v2516 = vunpack.c.l.b16 %v2445
    %v2517 = vunpack.c.l.b16 %v2446
    %v2518 = vunpack.c.l.b16 %v2447
    %v2519 = vunpack.c.l.b16 %v2448
    %v2520 = vunpack.c.l.b16 %v2449
    %v2521 = vunpack.c.l.b16 %v2450
    %v2522 = vunpack.c.l.b16 %v2451
    %v2523 = vunpack.c.l.b16 %v2452
    %v2524 = vunpack.c.l.b16 %v2453
    %v2525 = vunpack.c.l.b16 %v2454
    %v2526 = vunpack.c.l.b16 %v2455
    %v2527 = vunpack.c.l.b16 %v2456
    %v2528 = vunpack.c.l.b16 %v2457
    %v2529 = vunpack.c.l.b16 %v2458
    %v2530 = vunpack.c.l.b16 %v2459
    %v2531 = vunpack.c.l.b16 %v2460
    %v2532 = vunpack.c.l.b16 %v2461
    %v2533 = vunpack.c.l.b16 %v2462
    %v2534 = vunpack.c.l.b16 %v2463
    %v2535 = vpack.c.b16 %v2504, %v2503
    %v2536 = vpack.c.b16 %v2506, %v2505
    %v2537 = vpack.c.b16 %v2508, %v2507
    %v2538 = vpack.c.b16 %v2510, %v2509
    %v2539 = vpack.c.b16 %v2512, %v2511
    %v2540 = vpack.c.b16 %v2514, %v2513
    %v2541 = vpack.c.b16 %v2516, %v2515
    %v2542 = vpack.c.b16 %v2518, %v2517
    %v2543 = vpack.c.b16 %v2520, %v2519
    %v2544 = vpack.c.b16 %v2522, %v2521
    %v2545 = vpack.c.b16 %v2524, %v2523
    %v2546 = vpack.c.b16 %v2526, %v2525
    %v2547 = vpack.c.b16 %v2528, %v2527
    %v2548 = vpack.c.b16 %v2530, %v2529
    %v2549 = vpack.c.b16 %v2532, %v2531
    %v2550 = vpack.c.b16 %v2534, %v2533
    %2567 = vmatprep.subr.bf16.mxu0 0
    %2568 = vmatpush1.bf16.msra.mxu0 %v2542
    %2569 = vmatprep.subr.bf16.mxu0 0
    %2570 = vmatpush1.bf16.msra.mxu0 %v2541
    %2571 = vmatprep.subr.bf16.mxu0 0
    %2572 = vmatpush1.bf16.msra.mxu0 %v2540
    %2573 = vmatprep.subr.bf16.mxu0 0
    %2574 = vmatpush1.bf16.msra.mxu0 %v2539
    %2575 = vmatprep.subr.bf16.mxu0 0
    %2576 = vmatpush1.bf16.msra.mxu0 %v2538
    %2577 = vmatprep.subr.bf16.mxu0 0
    %2578 = vmatpush1.bf16.msra.mxu0 %v2537
    %2579 = vmatprep.subr.bf16.mxu0 0
    %2580 = vmatpush1.bf16.msra.mxu0 %v2536
    %2581 = vmatprep.subr.bf16.mxu0 0
    %2582 = vmatpush1.bf16.msra.mxu0 %v2535
    %2583 = vmatprep.subr.bf16.mxu0 0
    %2584 = vmatpush2.bf16.msra.mxu0 %v2550
    %2585 = vmatprep.subr.bf16.mxu0 0
    %2586 = vmatpush2.bf16.msra.mxu0 %v2549
    %2587 = vmatprep.subr.bf16.mxu0 0
    %2588 = vmatpush2.bf16.msra.mxu0 %v2548
    %2589 = vmatprep.subr.bf16.mxu0 0
    %2590 = vmatpush2.bf16.msra.mxu0 %v2547
    %2591 = vmatprep.subr.bf16.mxu0 0
    %2592 = vmatpush2.bf16.msra.mxu0 %v2546
    %2593 = vmatprep.subr.bf16.mxu0 0
    %2594 = vmatpush2.bf16.msra.mxu0 %v2545
    %2595 = vmatprep.subr.bf16.mxu0 0
    %2596 = vmatpush2.bf16.msra.mxu0 %v2544
    %2597 = vmatprep.subr.bf16.mxu0 0
    %2598 = vmatpush2.bf16.msra.mxu0 %v2543
    %2599 = vmatprep.mubr.bf16.mxu0 %v2431
    %2600 = vmatmul.mubr.bf16.gmra.mxu0 %v2430
    %v2601 = vpop.f32.mrf.mxu0
    %v2602 = vadd.f32 %v2469, %v2601
    %v2603 = vpop.f32.mrf.mxu0
    %v2604 = vpop.f32.mrf.mxu0
    %v2605 = vadd.f32 %v2469, %v2604
    %v2606 = vpop.f32.mrf.mxu0
    %2607 = vdwg.mxu0
    %2608 = vst [vmem:[#allocation5] sm:$0xff] %v2602
    %2609 = vst [vmem:[#allocation5 + $0x8] sm:$0xff] %v2605
    // Predicated region
    $region42: #{mlp_forward.1} parent=1 // pred_check
      _
    $region43: #{mlp_forward.1} parent=1 // pred_check_branch
      %2611 = sbr.rel (0) target = $region45
    $region44: #{mlp_forward.1} parent=1 // pred_region
      %s2613 = ssub.s32 256, 256
      %2614 = vsyncadd [#allocation4], %s2613
      %s2615 = sshll.u32 [#allocation5], 4
      %s2616 = int_to_ptr.vmem [resolvable:$true] %s2615
      %2621 = dma.vmem_to_hbm [thread:$0]  %s2616, 256, %s9, [#allocation4], 128, 128, 8
    $region45: #{mlp_forward.1} parent=1 // pred_fallthru
      _
    // Predicated region
    $region46: #{mlp_forward.1} parent=1 // pred_check
      _
    $region47: #{mlp_forward.1} parent=1 // pred_check_branch
      %2623 = sbr.rel (0) target = $region49
    $region48: #{mlp_forward.1} parent=1 // pred_region
      %2624 = dma.done [#allocation4], 256
    $region49: #{mlp_forward.1} parent=1 // pred_fallthru
      _
    %2625 = vsyncpa [#allocation3], 1
    %2626 = vsyncpa [#allocation4], 1

</llo_original>
